<compile_context>
chip_gen: v7x
topology: tpu7x:2x2x1
jax: 0.10.0
libtpu: 0.0.40
codegen_flags: <defaults>
</compile_context>

<pallas_src>
import functools

import jax
import jax.numpy as jnp
from jax.experimental import pallas as pl
from jax.experimental.pallas import tpu as pltpu

_MIB = 1024 * 1024


def _cdiv(a: int, b: int) -> int:
    return -(-a // b)


def _round_up(x: int, m: int) -> int:
    return _cdiv(x, m) * m


def _vmem_capacity_bytes() -> int:
    try:
        return int(pltpu.get_tpu_info().vmem_capacity_bytes)
    except Exception:
        return 64 * _MIB  # conservative default (v7x per-TC VMEM)


def _const_spec(block_shape, index_map):
    """BlockSpec for a constant-index (VMEM-resident) operand: single buffer."""
    try:
        return pl.BlockSpec(block_shape, index_map, pipeline_mode=pl.Buffered(1))
    except TypeError:  # older jax without pipeline_mode / Buffered
        return pl.BlockSpec(block_shape, index_map)


# ---------------------------------------------------------------------------
# Kernels
# ---------------------------------------------------------------------------
def _mlp_kernel_resident(x_ref, w1_ref, b1_ref, w2_ref, b2_ref, w3_ref, b3_ref,
                         o_ref):
    """All three weight matrices resident in VMEM; one row-tile per grid step."""
    cdt = w1_ref.dtype  # MXU compute dtype (bf16 on the fast path)
    x = x_ref[...].astype(cdt)
    h1 = jnp.dot(x, w1_ref[...], preferred_element_type=jnp.float32)
    h1 = jnp.maximum(h1 + b1_ref[...].astype(jnp.float32), 0.0)
    h2 = jnp.dot(h1.astype(cdt), w2_ref[...], preferred_element_type=jnp.float32)
    h2 = jnp.maximum(h2 + b2_ref[...].astype(jnp.float32), 0.0)
    y = jnp.dot(h2.astype(cdt), w3_ref[...], preferred_element_type=jnp.float32)
    o_ref[...] = (y + b3_ref[...].astype(jnp.float32)).astype(o_ref.dtype)


def _mlp_kernel_streamed(x_ref, w1_ref, b1_ref, w2_ref, b2_ref, w3_ref, b3_ref,
                         o_ref, h1_ref, acc_ref):
    """W2 column-chunks / W3 row-chunks stream over grid axis 1 ("arbitrary").

    h1 (tm x mid, f32) is computed once per row tile and kept in a VMEM
    scratch; the output accumulates in an f32 scratch and is stored on the
    last chunk.
    """
    j = pl.program_id(1)
    cdt = w2_ref.dtype

    @pl.when(j == 0)
    def _():
        x = x_ref[...].astype(w1_ref.dtype)
        h1 = jnp.dot(x, w1_ref[...], preferred_element_type=jnp.float32)
        h1_ref[...] = jnp.maximum(h1 + b1_ref[...].astype(jnp.float32), 0.0)
        acc_ref[...] = jnp.zeros_like(acc_ref)

    h2 = jnp.dot(h1_ref[...].astype(cdt), w2_ref[...],
                 preferred_element_type=jnp.float32)
    h2 = jnp.maximum(h2 + b2_ref[...].astype(jnp.float32), 0.0)
    acc_ref[...] += jnp.dot(h2.astype(w3_ref.dtype), w3_ref[...],
                            preferred_element_type=jnp.float32)

    @pl.when(j == pl.num_programs(1) - 1)
    def _():
        o_ref[...] = (acc_ref[...]
                      + b3_ref[...].astype(jnp.float32)).astype(o_ref.dtype)


# ---------------------------------------------------------------------------
# Wrapper
# ---------------------------------------------------------------------------
def _choose_tm(N: int, tm_req: int, sub: int) -> int:
    # >=2 row tiles whenever the problem allows it (v7x megacore + DMA overlap),
    # but never a tile bigger than the (sublane-rounded) problem.
    tm = min(int(tm_req), _round_up(_cdiv(N, 2), 256))
    tm = min(tm, _round_up(N, sub))
    return max(sub, _round_up(tm, sub))


@functools.partial(jax.jit, static_argnames=("tm", "use_bf16", "k_chunk"))
def audio_mlp_forward(x, w1, b1, w2, b2, w3, b3, *, tm=512, use_bf16=True,
                      k_chunk=None):
    """x: (B, H, W, C). Weights stored as (in, out). Returns (B, H, W, out_dim)."""
    B, H, W, C = x.shape
    in_dim = C
    mid_dim = w1.shape[1]
    out_dim = w3.shape[1]
    N = B * H * W
    x2d = x.reshape(N, C)

    # --- bf16 MXU path: cast weights once here (ideally they'd be stored bf16).
    if use_bf16:
        w1 = w1.astype(jnp.bfloat16)
        w2 = w2.astype(jnp.bfloat16)
        w3 = w3.astype(jnp.bfloat16)

    # --- Lane-dense output: pad out_dim to a multiple of 128 (zero cols/bias).
    out_p = _round_up(out_dim, 128)
    if out_p != out_dim:
        w3 = jnp.pad(w3, ((0, 0), (0, out_p - out_dim)))
        b3 = jnp.pad(b3, ((0, out_p - out_dim),))

    b1_2d = b1.reshape(1, mid_dim)
    b2_2d = b2.reshape(1, mid_dim)
    b3_2d = b3.reshape(1, out_p)

    # --- Row tiling. sub = sublane tile of the activation dtype.
    x_isz = x.dtype.itemsize
    sub = max(8, 32 // x_isz)
    tm = _choose_tm(N, tm, sub)
    n_row_tiles = _cdiv(N, tm)

    # --- VMEM footprints (each array's own itemsize).
    w_isz = w1.dtype.itemsize
    wbytes = (w1.size * w1.dtype.itemsize + w2.size * w2.dtype.itemsize
              + w3.size * w3.dtype.itemsize
              + b1_2d.size * b1_2d.dtype.itemsize
              + b2_2d.size * b2_2d.dtype.itemsize
              + b3_2d.size * b3_2d.dtype.itemsize)
    act_bytes = (2 * tm * in_dim * x_isz      # x tile, double-buffered
                 + 2 * tm * out_p * x_isz     # out tile, double-buffered
                 + 2 * tm * mid_dim * 4       # f32 h1 / h2
                 + tm * out_p * 4)            # f32 y
    resident_need = wbytes + act_bytes

    vmem_cap = _vmem_capacity_bytes()
    budget = int(vmem_cap * 0.85)             # ~54 MiB on v7x, ~109 MiB on v5e/v6e
    vmem_hard_cap = int(vmem_cap * 0.9)

    use_stream = (k_chunk is not None) or (resident_need > budget)
    if use_stream and k_chunk is None and mid_dim % 128 != 0:
        # TODO(synk): streamed path needs mid_dim % 128 == 0; fall back to resident.
        use_stream = False

    flops = 2 * N * (in_dim * mid_dim + mid_dim * mid_dim + mid_dim * out_p)

    if not use_stream:
        # -------------------- resident-weight path --------------------
        vmem_limit = int(min(max(resident_need * 5 // 4, 32 * _MIB),
                             vmem_hard_cap))
        hbm_bytes = N * in_dim * x_isz + N * out_p * x_isz + wbytes
        out2d = pl.pallas_call(
            _mlp_kernel_resident,
            out_shape=jax.ShapeDtypeStruct((N, out_p), x.dtype),
            grid=(n_row_tiles,),
            in_specs=[
                pl.BlockSpec((tm, in_dim), lambda i: (i, 0)),          # x row tile
                _const_spec((in_dim, mid_dim), lambda i: (0, 0)),      # W1 resident
                _const_spec((1, mid_dim), lambda i: (0, 0)),           # b1
                _const_spec((mid_dim, mid_dim), lambda i: (0, 0)),     # W2 resident
                _const_spec((1, mid_dim), lambda i: (0, 0)),           # b2
                _const_spec((mid_dim, out_p), lambda i: (0, 0)),       # W3 resident
                _const_spec((1, out_p), lambda i: (0, 0)),             # b3
            ],
            out_specs=pl.BlockSpec((tm, out_p), lambda i: (i, 0)),
            compiler_params=pltpu.CompilerParams(
                dimension_semantics=("parallel",),
                vmem_limit_bytes=vmem_limit,
            ),
            cost_estimate=pl.CostEstimate(flops=int(flops), transcendentals=0,
                                          bytes_accessed=int(hbm_bytes)),
        )(x2d, w1, b1_2d, w2, b2_2d, w3, b3_2d)
    else:
        # -------------------- streamed (k-chunked) path --------------------
        def _stream_need(cm):
            return (2 * tm * in_dim * x_isz                              # x tile
                    + w1.size * w1.dtype.itemsize                        # W1 resident
                    + b1_2d.size * b1_2d.dtype.itemsize
                    + b3_2d.size * b3_2d.dtype.itemsize
                    + 2 * (mid_dim * cm + cm * out_p) * w_isz            # W2/W3 chunks
                    + 2 * cm * b2_2d.dtype.itemsize                      # b2 chunk
                    + 2 * tm * out_p * x_isz                             # out tile
                    + tm * mid_dim * 4 + tm * out_p * 4                  # h1/acc scratch
                    + tm * cm * 4)                                       # f32 h2 chunk

        if k_chunk is not None:
            cm = int(k_chunk)
        else:
            cm = 128
            for cand in (4096, 2048, 1024, 512, 256, 128):
                if mid_dim % cand == 0 and _stream_need(cand) <= budget:
                    cm = cand
                    break
        assert mid_dim % cm == 0 and cm % 128 == 0, (mid_dim, cm)
        n_k = mid_dim // cm

        vmem_limit = int(min(max(_stream_need(cm) * 5 // 4, 32 * _MIB),
                             vmem_hard_cap))
        hbm_bytes = (N * in_dim * x_isz + N * out_p * x_isz
                     + w1.size * w1.dtype.itemsize
                     + n_row_tiles * (w2.size + w3.size) * w_isz)
        out2d = pl.pallas_call(
            _mlp_kernel_streamed,
            out_shape=jax.ShapeDtypeStruct((N, out_p), x.dtype),
            grid=(n_row_tiles, n_k),
            in_specs=[
                pl.BlockSpec((tm, in_dim), lambda i, j: (i, 0)),         # x row tile
                _const_spec((in_dim, mid_dim), lambda i, j: (0, 0)),     # W1 resident
                _const_spec((1, mid_dim), lambda i, j: (0, 0)),          # b1
                pl.BlockSpec((mid_dim, cm), lambda i, j: (0, j)),        # W2 col chunk
                pl.BlockSpec((1, cm), lambda i, j: (0, j)),              # b2 chunk
                pl.BlockSpec((cm, out_p), lambda i, j: (j, 0)),          # W3 row chunk
                _const_spec((1, out_p), lambda i, j: (0, 0)),            # b3
            ],
            out_specs=pl.BlockSpec((tm, out_p), lambda i, j: (i, 0)),
            scratch_shapes=[pltpu.VMEM((tm, mid_dim), jnp.float32),      # h1
                            pltpu.VMEM((tm, out_p), jnp.float32)],       # y acc
            compiler_params=pltpu.CompilerParams(
                dimension_semantics=("parallel", "arbitrary"),
                vmem_limit_bytes=vmem_limit,
            ),
            cost_estimate=pl.CostEstimate(flops=int(flops), transcendentals=0,
                                          bytes_accessed=int(hbm_bytes)),
        )(x2d, w1, b1_2d, w2, b2_2d, w3, b3_2d)

    if out_p != out_dim:
        out2d = out2d[:, :out_dim]
    return out2d.reshape(B, H, W, out_dim)


# ---------------------------------------------------------------------------
# Parameters / reference
# ---------------------------------------------------------------------------
def init_params(key, in_dim, mid_dim, out_dim, dtype=jnp.float32):
    """Deterministic synthetic parameters. Weights stored as (in, out)."""
    k1, k2, k3, k4, k5, k6 = jax.random.split(key, 6)
    s1 = 1.0 / jnp.sqrt(in_dim)
    s2 = 1.0 / jnp.sqrt(mid_dim)
    w1 = jax.random.uniform(k1, (in_dim, mid_dim), dtype, -s1, s1)
    b1 = jax.random.uniform(k2, (mid_dim,), dtype, -s1, s1)
    w2 = jax.random.uniform(k3, (mid_dim, mid_dim), dtype, -s2, s2)
    b2 = jax.random.uniform(k4, (mid_dim,), dtype, -s2, s2)
    w3 = jax.random.uniform(k5, (mid_dim, out_dim), dtype, -s2, s2)
    b3 = jax.random.uniform(k6, (out_dim,), dtype, -s2, s2)
    return w1, b1, w2, b2, w3, b3


def reference_forward(x, w1, b1, w2, b2, w3, b3):
    B, H, W, C = x.shape
    h = x.reshape(B, -1, C)
    h = jnp.maximum(h @ w1 + b1, 0.0)
    h = jnp.maximum(h @ w2 + b2, 0.0)
    h = h @ w3 + b3
    return h.reshape(B, H, W, -1)


if __name__ == "__main__":
    # Small shapes consistent with the module (scaled-down in/middle/out dims).
    # N = 2*12*16 = 384 tokens -> tm=256, 2 row tiles, last one partial (masked
    # store); out_dim = 64 < 128 -> exercises the lane-dense output padding.
    B, H, W = 2, 12, 16
    in_dim, mid_dim, out_dim = 128, 256, 64

    key = jax.random.PRNGKey(0)
    kx, kp = jax.random.split(key)
    x = jax.random.normal(kx, (B, H, W, in_dim), jnp.float32)
    params = init_params(kp, in_dim, mid_dim, out_dim)

    ref = reference_forward(x, *params)

    # 1) fp32 path (resident weights) -- tight tolerance vs. fp32 reference.
    out_fp32 = jax.block_until_ready(audio_mlp_forward(x, *params, use_bf16=False))
    assert out_fp32.shape == (B, H, W, out_dim), out_fp32.shape
    err = float(jnp.max(jnp.abs(out_fp32 - ref)))
    assert jnp.allclose(out_fp32, ref, atol=1e-3, rtol=1e-3), err

    # 2) default bf16-MXU path (resident weights).  Inter-layer activations are
    #    narrowed to bf16, so use a documented looser tolerance (~1e-2 abs).
    out_bf16 = jax.block_until_ready(audio_mlp_forward(x, *params))
    err = float(jnp.max(jnp.abs(out_bf16 - ref)))
    assert jnp.allclose(out_bf16, ref, atol=2e-2, rtol=2e-2), err

    # 3) streamed (k-chunked) path forced via k_chunk -- same math, chunked W2/W3.
    out_stream = jax.block_until_ready(audio_mlp_forward(x, *params, k_chunk=128))
    err = float(jnp.max(jnp.abs(out_stream - ref)))
    assert jnp.allclose(out_stream, ref, atol=2e-2, rtol=2e-2), err

    print("KERNEL_OK")
</pallas_src>

<mosaic_0001>
module attributes {stable_mosaic.version = 11 : i64} {
  func.func @_mlp_kernel_resident(%arg0: i32, %arg1: memref<256x128xf32, #tpu.memory_space<vmem>>, %arg2: memref<128x256xf32, #tpu.memory_space<vmem>>, %arg3: memref<1x256xf32, #tpu.memory_space<vmem>>, %arg4: memref<256x256xf32, #tpu.memory_space<vmem>>, %arg5: memref<1x256xf32, #tpu.memory_space<vmem>>, %arg6: memref<256x128xf32, #tpu.memory_space<vmem>>, %arg7: memref<1x128xf32, #tpu.memory_space<vmem>>, %arg8: memref<256x128xf32, #tpu.memory_space<vmem>>) attributes {dimension_semantics = [#tpu.dimension_semantics<parallel>], iteration_bounds = array<i64: 2>, scalar_prefetch = 0 : i64, scratch_operands = 0 : i64, tpu.core_type = #tpu.core_type<tc>, window_params = [{transform_indices = @transform_0, window_bounds = array<i64: 256, 128>}, {pipeline_mode = #tpu.pipeline_mode<synchronous>, transform_indices = @transform_1, window_bounds = array<i64: 128, 256>}, {pipeline_mode = #tpu.pipeline_mode<synchronous>, transform_indices = @transform_2, window_bounds = array<i64: 1, 256>}, {pipeline_mode = #tpu.pipeline_mode<synchronous>, transform_indices = @transform_3, window_bounds = array<i64: 256, 256>}, {pipeline_mode = #tpu.pipeline_mode<synchronous>, transform_indices = @transform_4, window_bounds = array<i64: 1, 256>}, {pipeline_mode = #tpu.pipeline_mode<synchronous>, transform_indices = @transform_5, window_bounds = array<i64: 256, 128>}, {pipeline_mode = #tpu.pipeline_mode<synchronous>, transform_indices = @transform_6, window_bounds = array<i64: 1, 128>}, {transform_indices = @transform_7, window_bounds = array<i64: 256, 128>}]} {
    %c0 = arith.constant 0 : index
    %c0_0 = arith.constant 0 : index
    %0 = vector.load %arg1[%c0, %c0_0] : memref<256x128xf32, #tpu.memory_space<vmem>>, vector<256x128xf32>
    %c0_1 = arith.constant 0 : index
    %c0_2 = arith.constant 0 : index
    %1 = vector.load %arg2[%c0_1, %c0_2] : memref<128x256xf32, #tpu.memory_space<vmem>>, vector<128x256xf32>
    %cst = arith.constant dense<0.000000e+00> : vector<256x256xf32>
    %2 = tpu.matmul %0, %1, %cst {dimension_numbers = #tpu.dot_dimension_numbers<[1], [0], [0], [1], [0, 0, 1, 1], [], []>} : vector<256x128xf32>, vector<128x256xf32>, vector<256x256xf32> -> vector<256x256xf32>
    %c0_3 = arith.constant 0 : index
    %c0_4 = arith.constant 0 : index
    %3 = vector.load %arg3[%c0_3, %c0_4] : memref<1x256xf32, #tpu.memory_space<vmem>>, vector<1x256xf32>
    %4 = vector.broadcast %3 : vector<1x256xf32> to vector<256x256xf32>
    %5 = arith.addf %2, %4 : vector<256x256xf32>
    %cst_5 = arith.constant 0.000000e+00 : f32
    %6 = vector.broadcast %cst_5 : f32 to vector<256x256xf32>
    %7 = arith.maximumf %5, %6 : vector<256x256xf32>
    %c0_6 = arith.constant 0 : index
    %c0_7 = arith.constant 0 : index
    %8 = vector.load %arg4[%c0_6, %c0_7] : memref<256x256xf32, #tpu.memory_space<vmem>>, vector<256x256xf32>
    %cst_8 = arith.constant dense<0.000000e+00> : vector<256x256xf32>
    %9 = tpu.matmul %7, %8, %cst_8 {dimension_numbers = #tpu.dot_dimension_numbers<[1], [0], [0], [1], [0, 0, 1, 1], [], []>} : vector<256x256xf32>, vector<256x256xf32>, vector<256x256xf32> -> vector<256x256xf32>
    %c0_9 = arith.constant 0 : index
    %c0_10 = arith.constant 0 : index
    %10 = vector.load %arg5[%c0_9, %c0_10] : memref<1x256xf32, #tpu.memory_space<vmem>>, vector<1x256xf32>
    %11 = vector.broadcast %10 : vector<1x256xf32> to vector<256x256xf32>
    %12 = arith.addf %9, %11 : vector<256x256xf32>
    %cst_11 = arith.constant 0.000000e+00 : f32
    %13 = vector.broadcast %cst_11 : f32 to vector<256x256xf32>
    %14 = arith.maximumf %12, %13 : vector<256x256xf32>
    %c0_12 = arith.constant 0 : index
    %c0_13 = arith.constant 0 : index
    %15 = vector.load %arg6[%c0_12, %c0_13] : memref<256x128xf32, #tpu.memory_space<vmem>>, vector<256x128xf32>
    %cst_14 = arith.constant dense<0.000000e+00> : vector<256x128xf32>
    %16 = tpu.matmul %14, %15, %cst_14 {dimension_numbers = #tpu.dot_dimension_numbers<[1], [0], [0], [1], [0, 0, 1, 1], [], []>} : vector<256x256xf32>, vector<256x128xf32>, vector<256x128xf32> -> vector<256x128xf32>
    %c0_15 = arith.constant 0 : index
    %c0_16 = arith.constant 0 : index
    %17 = vector.load %arg7[%c0_15, %c0_16] : memref<1x128xf32, #tpu.memory_space<vmem>>, vector<1x128xf32>
    %18 = vector.broadcast %17 : vector<1x128xf32> to vector<256x128xf32>
    %19 = arith.addf %16, %18 : vector<256x128xf32>
    %c0_17 = arith.constant 0 : index
    %c0_18 = arith.constant 0 : index
    %20 = vector.load %arg8[%c0_17, %c0_18] : memref<256x128xf32, #tpu.memory_space<vmem>>, vector<256x128xf32>
    tpu.vector_store %arg8[%c0_17, %c0_18], %19 {strides = array<i32>} : memref<256x128xf32, #tpu.memory_space<vmem>>, vector<256x128xf32>,
    return
  }
  func.func @transform_0(%arg0: i32) -> (i32, i32) {
    %c0_i32 = arith.constant 0 : i32
    %c0_i32_0 = arith.constant 0 : i32
    return %arg0, %c0_i32 : i32, i32
  }
  func.func @transform_1(%arg0: i32) -> (i32, i32) {
    %c0_i32 = arith.constant 0 : i32
    %c0_i32_0 = arith.constant 0 : i32
    %c0_i32_1 = arith.constant 0 : i32
    return %c0_i32, %c0_i32_0 : i32, i32
  }
  func.func @transform_2(%arg0: i32) -> (i32, i32) {
    %c0_i32 = arith.constant 0 : i32
    %c0_i32_0 = arith.constant 0 : i32
    %c0_i32_1 = arith.constant 0 : i32
    return %c0_i32, %c0_i32_0 : i32, i32
  }
  func.func @transform_3(%arg0: i32) -> (i32, i32) {
    %c0_i32 = arith.constant 0 : i32
    %c0_i32_0 = arith.constant 0 : i32
    %c0_i32_1 = arith.constant 0 : i32
    return %c0_i32, %c0_i32_0 : i32, i32
  }
  func.func @transform_4(%arg0: i32) -> (i32, i32) {
    %c0_i32 = arith.constant 0 : i32
    %c0_i32_0 = arith.constant 0 : i32
    %c0_i32_1 = arith.constant 0 : i32
    return %c0_i32, %c0_i32_0 : i32, i32
  }
  func.func @transform_5(%arg0: i32) -> (i32, i32) {
    %c0_i32 = arith.constant 0 : i32
    %c0_i32_0 = arith.constant 0 : i32
    %c0_i32_1 = arith.constant 0 : i32
    return %c0_i32, %c0_i32_0 : i32, i32
  }
  func.func @transform_6(%arg0: i32) -> (i32, i32) {
    %c0_i32 = arith.constant 0 : i32
    %c0_i32_0 = arith.constant 0 : i32
    %c0_i32_1 = arith.constant 0 : i32
    return %c0_i32, %c0_i32_0 : i32, i32
  }
  func.func @transform_7(%arg0: i32) -> (i32, i32) {
    %c0_i32 = arith.constant 0 : i32
    %c0_i32_0 = arith.constant 0 : i32
    return %arg0, %c0_i32 : i32, i32
  }
}

</mosaic_0001>

<llo_original>
// kernel: audio_mlp_forward.1
$region0: #{audio_mlp_forward.1}
  #allocation0 [shape = 'u32[]', space=smem, size = 0x4, offset = 0x4, fixed_abs, tag = 'smem constant byte address 0x4 - core index']
  #allocation1 [shape = 'u32[144,128]{1,0:T(1,128)}', space=vmem, size = 0x12000, scoped, tag = 'internal scratch']
  %s0 = inlined_call_operand.vmem [shape: f32[384,128], index: 0, kind: input, shape index: {}]
  %s1 = inlined_call_operand.hbm [shape: f32[128,256], index: 1, kind: input, shape index: {}]
  %s2 = inlined_call_operand.vmem [shape: f32[1,256], index: 2, kind: input, shape index: {}]
  %s3 = inlined_call_operand.vmem [shape: f32[256,256], index: 3, kind: input, shape index: {}]
  %s4 = inlined_call_operand.vmem [shape: f32[1,256], index: 4, kind: input, shape index: {}]
  %s5 = inlined_call_operand.vmem [shape: f32[256,128], index: 5, kind: input, shape index: {}]
  %s6 = inlined_call_operand.vmem [shape: f32[1,128], index: 6, kind: input, shape index: {}]
  %s7 = inlined_call_operand.hbm [shape: f32[384,128], index: 7, kind: output, shape index: {}]
  %s8 = sld [smem:[#allocation0]]
  $region65: #{audio_mlp_forward.1} parent=0
    _
  %s10 = ssub.s32 1, %s8
  %s11 = scalar_select 0, %s10, %s8
  $region1: #{audio_mlp_forward.1} parent=0
    #allocation2 [shape = 'u8[131072]{0}', space=vmem, size = 0x20000, scoped, tag = 'input window, operand 1, single buffered']
    #allocation3 [shape = 's32[2]{0}', space=sflag, size = 0x8, scoped, tag = 'scoped memory for audio_mlp_forward.1']
    #allocation4 [shape = 's32[2]{0}', space=sflag, size = 0x8, scoped, tag = 'scoped memory for audio_mlp_forward.1']
    #allocation5 [shape = 'u8[262144]{0}', space=vmem, size = 0x40000, scoped, tag = 'output window, operand 0']
    %12 = vsyncpa [#allocation3], 0
    %13 = vsyncpa [#allocation4], 0
    %s14 = scalar_lea.sflag [#allocation4], 1
    %15 = vsyncpa %s14, 0
    loop: start=0, step=1, limit=4
    $region2: #{audio_mlp_forward.1} parent=1 // loop_pre_header
      _
    $region3: #{audio_mlp_forward.1} parent=1 // loop_header
      %s17 = sphi 0, %s21
      %p18 = scmp.ge.s32.totalorder %s17, 4
      %s27 = sphi 0, %s29
      %s30 = sphi 0, %s27
      %s31 = sphi 0, %s30
      %s47 = sphi 0, %s31
      %s51 = sphi 0, %s51
      %s53 = sphi 0, %s51
      %s54 = sphi 0, %s53
      %s68 = sphi 0, %s54
      %s72 = sphi 0, %s72
      %s74 = sphi 0, %s72
      %s75 = sphi 0, %s74
      %s89 = sphi 0, %s75
      %s93 = sphi 0, %s93
      %s95 = sphi 0, %s93
      %s96 = sphi 0, %s95
      %s110 = sphi 0, %s96
      %s114 = sphi 0, %s114
      %s116 = sphi 0, %s114
      %s117 = sphi 0, %s116
      %s131 = sphi 0, %s117
      %s135 = sphi 0, %s135
      %s137 = sphi 0, %s135
      %s138 = sphi 0, %s137
      %s152 = sphi 0, %s138
      %s156 = sphi 0, %s156
      %s158 = sphi 0, %s156
      %s159 = sphi 0, %s158
      %s173 = sphi 0, %s159
      %s179 = sphi 0, %s181
      %s182 = sphi 0, %s179
      %s183 = sphi 0, %s182
      %s199 = sphi 0, %s183
    $region4: #{audio_mlp_forward.1} parent=1 // loop_header_branch
      %20 = sbr.rel (%p18) target = $region8
    $region5: #{audio_mlp_forward.1} parent=1 // loop_body
      %s22 = ssub.s32 %s17, 1
      %s23 = ssub.s32 %s17, 2
      %s24 = sadd.s32 %s17, 1
      %s25 = ssub.s32 %s17, %s24
      %p26 = scmp.eq.s32.totalorder %s25, 0
      %s28 = sadd.s32 %s27, 1
      %s29 = scalar_select %p26, %s27, %s28
      %p32 = pneg %p26
      %p33 = scmp.eq.s32.totalorder %s17, 1
      %p34 = por %p32, %p33
      %p35 = scmp.ne.s32.totalorder %s27, %s30
      %p36 = scmp.eq.s32.totalorder %s17, 0
      %p37 = por %p35, %p36
      %p38 = scmp.ne.s32.totalorder %s27, %s30
      %p39 = scmp.eq.s32.totalorder %s22, 1
      %p40 = por %p38, %p39
      %p41 = scmp.ne.s32.totalorder %s30, %s31
      %p42 = scmp.eq.s32.totalorder %s22, 0
      %p43 = por %p41, %p42
      %p44 = scmp.ne.s32.totalorder %s30, %s31
      %p45 = scmp.eq.s32.totalorder %s23, 1
      %p46 = por %p44, %p45
      %p48 = scmp.ne.s32.totalorder %s31, %s47
      %p49 = scmp.eq.s32.totalorder %s23, 0
      %p50 = por %p48, %p49
      %s52 = sadd.s32 %s51, 1
      %p55 = scmp.eq.s32.totalorder %s17, 1
      %p56 = scmp.ne.s32.totalorder %s51, %s53
      %p57 = scmp.eq.s32.totalorder %s17, 0
      %p58 = por %p56, %p57
      %p59 = scmp.ne.s32.totalorder %s51, %s53
      %p60 = scmp.eq.s32.totalorder %s22, 1
      %p61 = por %p59, %p60
      %p62 = scmp.ne.s32.totalorder %s53, %s54
      %p63 = scmp.eq.s32.totalorder %s22, 0
      %p64 = por %p62, %p63
      %p65 = scmp.ne.s32.totalorder %s53, %s54
      %p66 = scmp.eq.s32.totalorder %s23, 1
      %p67 = por %p65, %p66
      %p69 = scmp.ne.s32.totalorder %s54, %s68
      %p70 = scmp.eq.s32.totalorder %s23, 0
      %p71 = por %p69, %p70
      %s73 = sadd.s32 %s72, 1
      %p76 = scmp.eq.s32.totalorder %s17, 1
      %p77 = scmp.ne.s32.totalorder %s72, %s74
      %p78 = scmp.eq.s32.totalorder %s17, 0
      %p79 = por %p77, %p78
      %p80 = scmp.ne.s32.totalorder %s72, %s74
      %p81 = scmp.eq.s32.totalorder %s22, 1
      %p82 = por %p80, %p81
      %p83 = scmp.ne.s32.totalorder %s74, %s75
      %p84 = scmp.eq.s32.totalorder %s22, 0
      %p85 = por %p83, %p84
      %p86 = scmp.ne.s32.totalorder %s74, %s75
      %p87 = scmp.eq.s32.totalorder %s23, 1
      %p88 = por %p86, %p87
      %p90 = scmp.ne.s32.totalorder %s75, %s89
      %p91 = scmp.eq.s32.totalorder %s23, 0
      %p92 = por %p90, %p91
      %s94 = sadd.s32 %s93, 1
      %p97 = scmp.eq.s32.totalorder %s17, 1
      %p98 = scmp.ne.s32.totalorder %s93, %s95
      %p99 = scmp.eq.s32.totalorder %s17, 0
      %p100 = por %p98, %p99
      %p101 = scmp.ne.s32.totalorder %s93, %s95
      %p102 = scmp.eq.s32.totalorder %s22, 1
      %p103 = por %p101, %p102
      %p104 = scmp.ne.s32.totalorder %s95, %s96
      %p105 = scmp.eq.s32.totalorder %s22, 0
      %p106 = por %p104, %p105
      %p107 = scmp.ne.s32.totalorder %s95, %s96
      %p108 = scmp.eq.s32.totalorder %s23, 1
      %p109 = por %p107, %p108
      %p111 = scmp.ne.s32.totalorder %s96, %s110
      %p112 = scmp.eq.s32.totalorder %s23, 0
      %p113 = por %p111, %p112
      %s115 = sadd.s32 %s114, 1
      %p118 = scmp.eq.s32.totalorder %s17, 1
      %p119 = scmp.ne.s32.totalorder %s114, %s116
      %p120 = scmp.eq.s32.totalorder %s17, 0
      %p121 = por %p119, %p120
      %p122 = scmp.ne.s32.totalorder %s114, %s116
      %p123 = scmp.eq.s32.totalorder %s22, 1
      %p124 = por %p122, %p123
      %p125 = scmp.ne.s32.totalorder %s116, %s117
      %p126 = scmp.eq.s32.totalorder %s22, 0
      %p127 = por %p125, %p126
      %p128 = scmp.ne.s32.totalorder %s116, %s117
      %p129 = scmp.eq.s32.totalorder %s23, 1
      %p130 = por %p128, %p129
      %p132 = scmp.ne.s32.totalorder %s117, %s131
      %p133 = scmp.eq.s32.totalorder %s23, 0
      %p134 = por %p132, %p133
      %s136 = sadd.s32 %s135, 1
      %p139 = scmp.eq.s32.totalorder %s17, 1
      %p140 = scmp.ne.s32.totalorder %s135, %s137
      %p141 = scmp.eq.s32.totalorder %s17, 0
      %p142 = por %p140, %p141
      %p143 = scmp.ne.s32.totalorder %s135, %s137
      %p144 = scmp.eq.s32.totalorder %s22, 1
      %p145 = por %p143, %p144
      %p146 = scmp.ne.s32.totalorder %s137, %s138
      %p147 = scmp.eq.s32.totalorder %s22, 0
      %p148 = por %p146, %p147
      %p149 = scmp.ne.s32.totalorder %s137, %s138
      %p150 = scmp.eq.s32.totalorder %s23, 1
      %p151 = por %p149, %p150
      %p153 = scmp.ne.s32.totalorder %s138, %s152
      %p154 = scmp.eq.s32.totalorder %s23, 0
      %p155 = por %p153, %p154
      %s157 = sadd.s32 %s156, 1
      %p160 = scmp.eq.s32.totalorder %s17, 1
      %p161 = scmp.ne.s32.totalorder %s156, %s158
      %p162 = scmp.eq.s32.totalorder %s17, 0
      %p163 = por %p161, %p162
      %p164 = scmp.ne.s32.totalorder %s156, %s158
      %p165 = scmp.eq.s32.totalorder %s22, 1
      %p166 = por %p164, %p165
      %p167 = scmp.ne.s32.totalorder %s158, %s159
      %p168 = scmp.eq.s32.totalorder %s22, 0
      %p169 = por %p167, %p168
      %p170 = scmp.ne.s32.totalorder %s158, %s159
      %p171 = scmp.eq.s32.totalorder %s23, 1
      %p172 = por %p170, %p171
      %p174 = scmp.ne.s32.totalorder %s159, %s173
      %p175 = scmp.eq.s32.totalorder %s23, 0
      %p176 = por %p174, %p175
      %s177 = ssub.s32 %s17, %s24
      %p178 = scmp.eq.s32.totalorder %s177, 0
      %s180 = sadd.s32 %s179, 1
      %s181 = scalar_select %p178, %s179, %s180
      %p184 = pneg %p178
      %p185 = scmp.eq.s32.totalorder %s17, 1
      %p186 = por %p184, %p185
      %p187 = scmp.ne.s32.totalorder %s179, %s182
      %p188 = scmp.eq.s32.totalorder %s17, 0
      %p189 = por %p187, %p188
      %p190 = scmp.ne.s32.totalorder %s179, %s182
      %p191 = scmp.eq.s32.totalorder %s22, 1
      %p192 = por %p190, %p191
      %p193 = scmp.ne.s32.totalorder %s182, %s183
      %p194 = scmp.eq.s32.totalorder %s22, 0
      %p195 = por %p193, %p194
      %p196 = scmp.ne.s32.totalorder %s182, %s183
      %p197 = scmp.eq.s32.totalorder %s23, 1
      %p198 = por %p196, %p197
      %p200 = scmp.ne.s32.totalorder %s183, %s199
      %p201 = scmp.eq.s32.totalorder %s23, 0
      %p202 = por %p200, %p201
      %p203 = scmp.le.s32.totalorder 1, %s17
      %p204 = scmp.lt.s32.totalorder %s17, 3
      %p205 = pnand %p203, %p204
      %p206 = pneg %p205
      // Predicated region
      $region9: #{audio_mlp_forward.1} parent=5 // pred_check
        _
      $region10: #{audio_mlp_forward.1} parent=5 // pred_check_branch
        %208 = sbr.rel (%p205) target = $region12
      $region11: #{audio_mlp_forward.1} parent=5 // pred_region
        %s209 = ssub.s32 %s17, 1
        // Predicated region
        $region13: #{audio_mlp_forward.1} parent=11 // pred_check
          %p210 = pneg %p64
        $region14: #{audio_mlp_forward.1} parent=11 // pred_check_branch
          %212 = sbr.rel (%p210) target = $region16
        $region15: #{audio_mlp_forward.1} parent=11 // pred_region
          %s214 = ssub.s32 4096, 4096
          %215 = vsyncadd [#allocation3], %s214
          %s216 = sshll.u32 [#allocation2], 4
          %s217 = int_to_ptr.vmem [resolvable:$true] %s216
          %222 = dma.hbm_to_vmem [thread:$0]  %s1, 4096, %s217, [#allocation3], 256, 256, 16
        $region16: #{audio_mlp_forward.1} parent=11 // pred_fallthru
          _
        // Predicated region
        $region17: #{audio_mlp_forward.1} parent=11 // pred_check
          %p223 = pneg %p85
        $region18: #{audio_mlp_forward.1} parent=11 // pred_check_branch
          %225 = sbr.rel (%p223) target = $region20
        $region19: #{audio_mlp_forward.1} parent=11 // pred_region
          _
        $region20: #{audio_mlp_forward.1} parent=11 // pred_fallthru
          _
        // Predicated region
        $region21: #{audio_mlp_forward.1} parent=11 // pred_check
          %p226 = pneg %p106
        $region22: #{audio_mlp_forward.1} parent=11 // pred_check_branch
          %228 = sbr.rel (%p226) target = $region24
        $region23: #{audio_mlp_forward.1} parent=11 // pred_region
          _
        $region24: #{audio_mlp_forward.1} parent=11 // pred_fallthru
          _
        // Predicated region
        $region25: #{audio_mlp_forward.1} parent=11 // pred_check
          %p229 = pneg %p127
        $region26: #{audio_mlp_forward.1} parent=11 // pred_check_branch
          %231 = sbr.rel (%p229) target = $region28
        $region27: #{audio_mlp_forward.1} parent=11 // pred_region
          _
        $region28: #{audio_mlp_forward.1} parent=11 // pred_fallthru
          _
        // Predicated region
        $region29: #{audio_mlp_forward.1} parent=11 // pred_check
          %p232 = pneg %p148
        $region30: #{audio_mlp_forward.1} parent=11 // pred_check_branch
          %234 = sbr.rel (%p232) target = $region32
        $region31: #{audio_mlp_forward.1} parent=11 // pred_region
          _
        $region32: #{audio_mlp_forward.1} parent=11 // pred_fallthru
          _
        // Predicated region
        $region33: #{audio_mlp_forward.1} parent=11 // pred_check
          %p235 = pneg %p169
        $region34: #{audio_mlp_forward.1} parent=11 // pred_check_branch
          %237 = sbr.rel (%p235) target = $region36
        $region35: #{audio_mlp_forward.1} parent=11 // pred_region
          _
        $region36: #{audio_mlp_forward.1} parent=11 // pred_fallthru
          _
      $region12: #{audio_mlp_forward.1} parent=5 // pred_fallthru
        _
      %p238 = scmp.lt.s32.totalorder %s17, 2
      // Predicated region
      $region37: #{audio_mlp_forward.1} parent=5 // pred_check
        %p239 = pneg %p238
      $region38: #{audio_mlp_forward.1} parent=5 // pred_check_branch
        %241 = sbr.rel (%p239) target = $region40
      $region39: #{audio_mlp_forward.1} parent=5 // pred_region
        // Predicated region
        $region41: #{audio_mlp_forward.1} parent=39 // pred_check
          %p242 = pneg %p37
        $region42: #{audio_mlp_forward.1} parent=39 // pred_check_branch
          %244 = sbr.rel (%p242) target = $region44
        $region43: #{audio_mlp_forward.1} parent=39 // pred_region
          %s245 = smul.u32 32, %s17
          %s246 = ssub.s32 48, %s245
          %p247 = scmp.lt.s32.totalorder %s246, 32
          %s248 = scalar_select %p247, %s246, 32
          %s249 = smul.u32 128, %s248
          %p250 = scmp.lt.s32.totalorder %s245, 47
          %s251 = scalar_select %p250, %s245, 47
          %s252 = smul.addr %s251, 8
          %s253 = scalar_lea.vmem %s0, %s252
          %s254 = smul.u32 32, %s17
          %s255 = ssub.s32 48, %s254
          %p256 = scmp.lt.s32.totalorder %s255, 32
          %s257 = scalar_select %p256, %s255, 32
          %s258 = smul.u32 128, %s257
        $region44: #{audio_mlp_forward.1} parent=39 // pred_fallthru
          _
      $region40: #{audio_mlp_forward.1} parent=5 // pred_fallthru
        _
      %p259 = scmp.le.s32.totalorder 1, %s17
      %p260 = scmp.lt.s32.totalorder %s17, 3
      %p261 = pnand %p259, %p260
      %p262 = pneg %p261
      // Predicated region
      $region45: #{audio_mlp_forward.1} parent=5 // pred_check
        _
      $region46: #{audio_mlp_forward.1} parent=5 // pred_check_branch
        %264 = sbr.rel (%p261) target = $region48
      $region47: #{audio_mlp_forward.1} parent=5 // pred_region
        %s265 = ssub.s32 %s17, 1
        // Predicated region
        $region49: #{audio_mlp_forward.1} parent=47 // pred_check
          %p266 = pneg %p64
        $region50: #{audio_mlp_forward.1} parent=47 // pred_check_branch
          %268 = sbr.rel (%p266) target = $region52
        $region51: #{audio_mlp_forward.1} parent=47 // pred_region
          %269 = dma.done [#allocation3], 4096
        $region52: #{audio_mlp_forward.1} parent=47 // pred_fallthru
          _
        %s270 = smul.u32 32, %s22
        %s271 = ssub.s32 48, %s270
        %p272 = scmp.lt.s32.totalorder %s271, 32
        %s273 = scalar_select %p272, %s271, 32
        %s274 = smul.u32 128, %s273
        %p275 = scmp.lt.s32.totalorder %s270, 47
        %s276 = scalar_select %p275, %s270, 47
        %s277 = smul.addr %s276, 8
        %s278 = scalar_lea.vmem %s0, %s277
        %p279 = pneg %p43
        %p280 = pneg %p40
        %p281 = pneg %p64
        %p282 = pneg %p61
        %p283 = pneg %p85
        %p284 = pneg %p82
        %p285 = pneg %p106
        %p286 = pneg %p103
        %p287 = pneg %p127
        %p288 = pneg %p124
        %p289 = pneg %p148
        %p290 = pneg %p145
        %p291 = pneg %p169
        %p292 = pneg %p166
        %p293 = pneg %p195
        %p294 = pneg %p192
        %s295 = sand.u32 %s182, 1
        %s296 = scalar_lea.sflag [#allocation4], %s295
        %s297 = sand.u32 %s182, 1
        %s298 = smul.addr %s297, 256
        %s299 = scalar_lea.vmem [#allocation5], %s298
        %s300 = smul.u32 32, %s22
        %s301 = ssub.s32 48, %s300
        %p302 = scmp.lt.s32.totalorder %s301, 32
        %s303 = scalar_select %p302, %s301, 32
        %s304 = smul.u32 128, %s303
        %p305 = scmp.lt.s32.totalorder %s300, 47
        %s306 = scalar_select %p305, %s300, 47
        %s307 = smul.addr %s306, 8
        %s308 = scalar_lea.vmem %s0, %s307
        %s309 = smul.u32 32, %s22
        %s310 = ssub.s32 48, %s309
        %p311 = scmp.lt.s32.totalorder %s310, 32
        %s312 = scalar_select %p311, %s310, 32
        %s313 = smul.u32 128, %s312
        %s314 = smul.u32 32, %s22
        %s315 = ssub.s32 48, %s314
        %p316 = scmp.lt.s32.totalorder %s315, 32
        %s317 = scalar_select %p316, %s315, 32
        %s318 = smul.u32 128, %s317
        %v319 = vld [vmem:[%s308] sm:$0xff]
        %v320 = vld [vmem:[%s308 + $0x8] sm:$0xff]
        %v321 = vld [vmem:[%s308 + $0x10] sm:$0xff]
        %v322 = vld [vmem:[%s308 + $0x18] sm:$0xff]
        %v323 = vld [vmem:[%s308 + $0x20] sm:$0xff]
        %v324 = vld [vmem:[%s308 + $0x28] sm:$0xff]
        %v325 = vld [vmem:[%s308 + $0x30] sm:$0xff]
        %v326 = vld [vmem:[%s308 + $0x38] sm:$0xff]
        %v327 = vld [vmem:[%s308 + $0x40] sm:$0xff]
        %v328 = vld [vmem:[%s308 + $0x48] sm:$0xff]
        %v329 = vld [vmem:[%s308 + $0x50] sm:$0xff]
        %v330 = vld [vmem:[%s308 + $0x58] sm:$0xff]
        %v331 = vld [vmem:[%s308 + $0x60] sm:$0xff]
        %v332 = vld [vmem:[%s308 + $0x68] sm:$0xff]
        %v333 = vld [vmem:[%s308 + $0x70] sm:$0xff]
        %v334 = vld [vmem:[%s308 + $0x78] sm:$0xff]
        %v335 = vld [vmem:[%s308 + $0x80] sm:$0xff]
        %v336 = vld [vmem:[%s308 + $0x88] sm:$0xff]
        %v337 = vld [vmem:[%s308 + $0x90] sm:$0xff]
        %v338 = vld [vmem:[%s308 + $0x98] sm:$0xff]
        %v339 = vld [vmem:[%s308 + $0xa0] sm:$0xff]
        %v340 = vld [vmem:[%s308 + $0xa8] sm:$0xff]
        %v341 = vld [vmem:[%s308 + $0xb0] sm:$0xff]
        %v342 = vld [vmem:[%s308 + $0xb8] sm:$0xff]
        %v343 = vld [vmem:[%s308 + $0xc0] sm:$0xff]
        %v344 = vld [vmem:[%s308 + $0xc8] sm:$0xff]
        %v345 = vld [vmem:[%s308 + $0xd0] sm:$0xff]
        %v346 = vld [vmem:[%s308 + $0xd8] sm:$0xff]
        %v347 = vld [vmem:[%s308 + $0xe0] sm:$0xff]
        %v348 = vld [vmem:[%s308 + $0xe8] sm:$0xff]
        %v349 = vld [vmem:[%s308 + $0xf0] sm:$0xff]
        %v350 = vld [vmem:[%s308 + $0xf8] sm:$0xff]
        %v351 = vld [vmem:[#allocation2] sm:$0xff]
        %v352 = vld [vmem:[#allocation2 + $0x8] sm:$0xff]
        %v353 = vld [vmem:[#allocation2 + $0x10] sm:$0xff]
        %v354 = vld [vmem:[#allocation2 + $0x18] sm:$0xff]
        %v355 = vld [vmem:[#allocation2 + $0x20] sm:$0xff]
        %v356 = vld [vmem:[#allocation2 + $0x28] sm:$0xff]
        %v357 = vld [vmem:[#allocation2 + $0x30] sm:$0xff]
        %v358 = vld [vmem:[#allocation2 + $0x38] sm:$0xff]
        %v359 = vld [vmem:[#allocation2 + $0x40] sm:$0xff]
        %v360 = vld [vmem:[#allocation2 + $0x48] sm:$0xff]
        %v361 = vld [vmem:[#allocation2 + $0x50] sm:$0xff]
        %v362 = vld [vmem:[#allocation2 + $0x58] sm:$0xff]
        %v363 = vld [vmem:[#allocation2 + $0x60] sm:$0xff]
        %v364 = vld [vmem:[#allocation2 + $0x68] sm:$0xff]
        %v365 = vld [vmem:[#allocation2 + $0x70] sm:$0xff]
        %v366 = vld [vmem:[#allocation2 + $0x78] sm:$0xff]
        %v367 = vld [vmem:[#allocation2 + $0x80] sm:$0xff]
        %v368 = vld [vmem:[#allocation2 + $0x88] sm:$0xff]
        %v369 = vld [vmem:[#allocation2 + $0x90] sm:$0xff]
        %v370 = vld [vmem:[#allocation2 + $0x98] sm:$0xff]
        %v371 = vld [vmem:[#allocation2 + $0xa0] sm:$0xff]
        %v372 = vld [vmem:[#allocation2 + $0xa8] sm:$0xff]
        %v373 = vld [vmem:[#allocation2 + $0xb0] sm:$0xff]
        %v374 = vld [vmem:[#allocation2 + $0xb8] sm:$0xff]
        %v375 = vld [vmem:[#allocation2 + $0xc0] sm:$0xff]
        %v376 = vld [vmem:[#allocation2 + $0xc8] sm:$0xff]
        %v377 = vld [vmem:[#allocation2 + $0xd0] sm:$0xff]
        %v378 = vld [vmem:[#allocation2 + $0xd8] sm:$0xff]
        %v379 = vld [vmem:[#allocation2 + $0xe0] sm:$0xff]
        %v380 = vld [vmem:[#allocation2 + $0xe8] sm:$0xff]
        %v381 = vld [vmem:[#allocation2 + $0xf0] sm:$0xff]
        %v382 = vld [vmem:[#allocation2 + $0xf8] sm:$0xff]
        %v383 = vld [vmem:[%s2] sm:$0x3]
        %v385 = vlaneseq
        %v386 = vshrl.u32 %v385, 7
        %v387 = vsub.s32 0, %v386
        %v388 = vrot.slane %v383, %v387
        %v389 = vlaneseq
        %v390 = vshrl.u32 %v389, 7
        %v391 = vsub.s32 1, %v390
        %v392 = vrot.slane %v383, %v391
        %395 = vmatprep.subr.mxu0 %v352
        %396 = vmatpush1.msra.mxu0 %v351
        %397 = vmatprep.subr.mxu0 %v354
        %398 = vmatpush1.msra.mxu0 %v353
        %399 = vmatprep.subr.mxu0 %v356
        %400 = vmatpush1.msra.mxu0 %v355
        %401 = vmatprep.subr.mxu0 %v358
        %402 = vmatpush1.msra.mxu0 %v357
        %403 = vmatprep.subr.mxu0 %v360
        %404 = vmatpush1.msra.mxu0 %v359
        %405 = vmatprep.subr.mxu0 %v362
        %406 = vmatpush1.msra.mxu0 %v361
        %407 = vmatprep.subr.mxu0 %v364
        %408 = vmatpush1.msra.mxu0 %v363
        %409 = vmatprep.subr.mxu0 %v366
        %410 = vmatpush1.msra.mxu0 %v365
        %411 = vmatprep.subr.mxu0 %v368
        %412 = vmatpush1.msra.mxu0 %v367
        %413 = vmatprep.subr.mxu0 %v370
        %414 = vmatpush1.msra.mxu0 %v369
        %415 = vmatprep.subr.mxu0 %v372
        %416 = vmatpush1.msra.mxu0 %v371
        %417 = vmatprep.subr.mxu0 %v374
        %418 = vmatpush1.msra.mxu0 %v373
        %419 = vmatprep.subr.mxu0 %v376
        %420 = vmatpush1.msra.mxu0 %v375
        %421 = vmatprep.subr.mxu0 %v378
        %422 = vmatpush1.msra.mxu0 %v377
        %423 = vmatprep.subr.mxu0 %v380
        %424 = vmatpush1.msra.mxu0 %v379
        %425 = vmatprep.subr.mxu0 %v382
        %426 = vmatpush1.msra.mxu0 %v381
        %427 = vmatprep.subr.mxu0 0.0
        %428 = vmatpush1.msra.mxu0 0.0
        %429 = vmatprep.subr.mxu0 0.0
        %430 = vmatpush1.msra.mxu0 0.0
        %431 = vmatprep.subr.mxu0 0.0
        %432 = vmatpush1.msra.mxu0 0.0
        %433 = vmatprep.subr.mxu0 0.0
        %434 = vmatpush1.msra.mxu0 0.0
        %435 = vmatprep.subr.mxu0 0.0
        %436 = vmatpush1.msra.mxu0 0.0
        %437 = vmatprep.subr.mxu0 0.0
        %438 = vmatpush1.msra.mxu0 0.0
        %439 = vmatprep.subr.mxu0 0.0
        %440 = vmatpush1.msra.mxu0 0.0
        %441 = vmatprep.subr.mxu0 0.0
        %442 = vmatpush1.msra.mxu0 0.0
        %443 = vmatprep.subr.mxu0 0.0
        %444 = vmatpush1.msra.mxu0 0.0
        %445 = vmatprep.subr.mxu0 0.0
        %446 = vmatpush1.msra.mxu0 0.0
        %447 = vmatprep.subr.mxu0 0.0
        %448 = vmatpush1.msra.mxu0 0.0
        %449 = vmatprep.subr.mxu0 0.0
        %450 = vmatpush1.msra.mxu0 0.0
        %451 = vmatprep.subr.mxu0 0.0
        %452 = vmatpush1.msra.mxu0 0.0
        %453 = vmatprep.subr.mxu0 0.0
        %454 = vmatpush1.msra.mxu0 0.0
        %455 = vmatprep.subr.mxu0 0.0
        %456 = vmatpush1.msra.mxu0 0.0
        %457 = vmatprep.subr.mxu0 0.0
        %458 = vmatpush1.msra.mxu0 0.0
        %459 = vmatprep.mubr.f32.mxu0 0.0
        %460 = vmatmul.mubr.f32.gmra.mrb[0].mxu0 %v319
        %v461 = vpop.f32.mrb[0].mxu0
        %v462 = vadd.f32 %v388, %v461
        %v463 = vpop.f32.mrb[0].mxu0
        %v464 = vadd.f32 %v392, %v463
        %465 = vmatprep.mubr.f32.mxu0 0.0
        %466 = vmatmul.mubr.f32.gmra.mrb[0].mxu0 %v320
        %v467 = vpop.f32.mrb[0].mxu0
        %v468 = vadd.f32 %v388, %v467
        %v469 = vpop.f32.mrb[0].mxu0
        %v470 = vadd.f32 %v392, %v469
        %471 = vmatprep.mubr.f32.mxu0 0.0
        %472 = vmatmul.mubr.f32.gmra.mrb[0].mxu0 %v321
        %v473 = vpop.f32.mrb[0].mxu0
        %v474 = vadd.f32 %v388, %v473
        %v475 = vpop.f32.mrb[0].mxu0
        %v476 = vadd.f32 %v392, %v475
        %477 = vmatprep.mubr.f32.mxu0 0.0
        %478 = vmatmul.mubr.f32.gmra.mrb[0].mxu0 %v322
        %v479 = vpop.f32.mrb[0].mxu0
        %v480 = vadd.f32 %v388, %v479
        %v481 = vpop.f32.mrb[0].mxu0
        %v482 = vadd.f32 %v392, %v481
        %483 = vmatprep.mubr.f32.mxu0 0.0
        %484 = vmatmul.mubr.f32.gmra.mrb[0].mxu0 %v323
        %v485 = vpop.f32.mrb[0].mxu0
        %v486 = vadd.f32 %v388, %v485
        %v487 = vpop.f32.mrb[0].mxu0
        %v488 = vadd.f32 %v392, %v487
        %489 = vmatprep.mubr.f32.mxu0 0.0
        %490 = vmatmul.mubr.f32.gmra.mrb[0].mxu0 %v324
        %v491 = vpop.f32.mrb[0].mxu0
        %v492 = vadd.f32 %v388, %v491
        %v493 = vpop.f32.mrb[0].mxu0
        %v494 = vadd.f32 %v392, %v493
        %495 = vmatprep.mubr.f32.mxu0 0.0
        %496 = vmatmul.mubr.f32.gmra.mrb[0].mxu0 %v325
        %v497 = vpop.f32.mrb[0].mxu0
        %v498 = vadd.f32 %v388, %v497
        %v499 = vpop.f32.mrb[0].mxu0
        %v500 = vadd.f32 %v392, %v499
        %501 = vmatprep.mubr.f32.mxu0 0.0
        %502 = vmatmul.mubr.f32.gmra.mrb[0].mxu0 %v326
        %v503 = vpop.f32.mrb[0].mxu0
        %v504 = vadd.f32 %v388, %v503
        %v505 = vpop.f32.mrb[0].mxu0
        %v506 = vadd.f32 %v392, %v505
        %507 = vmatprep.mubr.f32.mxu0 0.0
        %508 = vmatmul.mubr.f32.gmra.mrb[0].mxu0 %v327
        %v509 = vpop.f32.mrb[0].mxu0
        %v510 = vadd.f32 %v388, %v509
        %v511 = vpop.f32.mrb[0].mxu0
        %v512 = vadd.f32 %v392, %v511
        %513 = vmatprep.mubr.f32.mxu0 0.0
        %514 = vmatmul.mubr.f32.gmra.mrb[0].mxu0 %v328
        %v515 = vpop.f32.mrb[0].mxu0
        %v516 = vadd.f32 %v388, %v515
        %v517 = vpop.f32.mrb[0].mxu0
        %v518 = vadd.f32 %v392, %v517
        %519 = vmatprep.mubr.f32.mxu0 0.0
        %520 = vmatmul.mubr.f32.gmra.mrb[0].mxu0 %v329
        %v521 = vpop.f32.mrb[0].mxu0
        %v522 = vadd.f32 %v388, %v521
        %v523 = vpop.f32.mrb[0].mxu0
        %v524 = vadd.f32 %v392, %v523
        %525 = vmatprep.mubr.f32.mxu0 0.0
        %526 = vmatmul.mubr.f32.gmra.mrb[0].mxu0 %v330
        %v527 = vpop.f32.mrb[0].mxu0
        %v528 = vadd.f32 %v388, %v527
        %v529 = vpop.f32.mrb[0].mxu0
        %v530 = vadd.f32 %v392, %v529
        %531 = vmatprep.mubr.f32.mxu0 0.0
        %532 = vmatmul.mubr.f32.gmra.mrb[0].mxu0 %v331
        %v533 = vpop.f32.mrb[0].mxu0
        %v534 = vadd.f32 %v388, %v533
        %v535 = vpop.f32.mrb[0].mxu0
        %v536 = vadd.f32 %v392, %v535
        %537 = vmatprep.mubr.f32.mxu0 0.0
        %538 = vmatmul.mubr.f32.gmra.mrb[0].mxu0 %v332
        %v539 = vpop.f32.mrb[0].mxu0
        %v540 = vadd.f32 %v388, %v539
        %v541 = vpop.f32.mrb[0].mxu0
        %v542 = vadd.f32 %v392, %v541
        %543 = vmatprep.mubr.f32.mxu0 0.0
        %544 = vmatmul.mubr.f32.gmra.mrb[0].mxu0 %v333
        %v545 = vpop.f32.mrb[0].mxu0
        %v546 = vadd.f32 %v388, %v545
        %v547 = vpop.f32.mrb[0].mxu0
        %v548 = vadd.f32 %v392, %v547
        %549 = vmatprep.mubr.f32.mxu0 0.0
        %550 = vmatmul.mubr.f32.gmra.mrb[0].mxu0 %v334
        %v551 = vpop.f32.mrb[0].mxu0
        %v552 = vadd.f32 %v388, %v551
        %v553 = vpop.f32.mrb[0].mxu0
        %v554 = vadd.f32 %v392, %v553
        %555 = vmatprep.mubr.f32.mxu0 0.0
        %556 = vmatmul.mubr.f32.gmra.mrb[0].mxu0 %v335
        %v557 = vpop.f32.mrb[0].mxu0
        %v558 = vadd.f32 %v388, %v557
        %v559 = vpop.f32.mrb[0].mxu0
        %v560 = vadd.f32 %v392, %v559
        %561 = vmatprep.mubr.f32.mxu0 0.0
        %562 = vmatmul.mubr.f32.gmra.mrb[0].mxu0 %v336
        %v563 = vpop.f32.mrb[0].mxu0
        %v564 = vadd.f32 %v388, %v563
        %v565 = vpop.f32.mrb[0].mxu0
        %v566 = vadd.f32 %v392, %v565
        %567 = vmatprep.mubr.f32.mxu0 0.0
        %568 = vmatmul.mubr.f32.gmra.mrb[0].mxu0 %v337
        %v569 = vpop.f32.mrb[0].mxu0
        %v570 = vadd.f32 %v388, %v569
        %v571 = vpop.f32.mrb[0].mxu0
        %v572 = vadd.f32 %v392, %v571
        %573 = vmatprep.mubr.f32.mxu0 0.0
        %574 = vmatmul.mubr.f32.gmra.mrb[0].mxu0 %v338
        %v575 = vpop.f32.mrb[0].mxu0
        %v576 = vadd.f32 %v388, %v575
        %v577 = vpop.f32.mrb[0].mxu0
        %v578 = vadd.f32 %v392, %v577
        %579 = vmatprep.mubr.f32.mxu0 0.0
        %580 = vmatmul.mubr.f32.gmra.mrb[0].mxu0 %v339
        %v581 = vpop.f32.mrb[0].mxu0
        %v582 = vadd.f32 %v388, %v581
        %v583 = vpop.f32.mrb[0].mxu0
        %v584 = vadd.f32 %v392, %v583
        %585 = vmatprep.mubr.f32.mxu0 0.0
        %586 = vmatmul.mubr.f32.gmra.mrb[0].mxu0 %v340
        %v587 = vpop.f32.mrb[0].mxu0
        %v588 = vadd.f32 %v388, %v587
        %v589 = vpop.f32.mrb[0].mxu0
        %v590 = vadd.f32 %v392, %v589
        %591 = vmatprep.mubr.f32.mxu0 0.0
        %592 = vmatmul.mubr.f32.gmra.mrb[0].mxu0 %v341
        %v593 = vpop.f32.mrb[0].mxu0
        %v594 = vadd.f32 %v388, %v593
        %v595 = vpop.f32.mrb[0].mxu0
        %v596 = vadd.f32 %v392, %v595
        %597 = vmatprep.mubr.f32.mxu0 0.0
        %598 = vmatmul.mubr.f32.gmra.mrb[0].mxu0 %v342
        %v599 = vpop.f32.mrb[0].mxu0
        %v600 = vadd.f32 %v388, %v599
        %v601 = vpop.f32.mrb[0].mxu0
        %v602 = vadd.f32 %v392, %v601
        %603 = vmatprep.mubr.f32.mxu0 0.0
        %604 = vmatmul.mubr.f32.gmra.mrb[0].mxu0 %v343
        %v605 = vpop.f32.mrb[0].mxu0
        %v606 = vadd.f32 %v388, %v605
        %v607 = vpop.f32.mrb[0].mxu0
        %v608 = vadd.f32 %v392, %v607
        %609 = vmatprep.mubr.f32.mxu0 0.0
        %610 = vmatmul.mubr.f32.gmra.mrb[0].mxu0 %v344
        %v611 = vpop.f32.mrb[0].mxu0
        %v612 = vadd.f32 %v388, %v611
        %v613 = vpop.f32.mrb[0].mxu0
        %v614 = vadd.f32 %v392, %v613
        %615 = vmatprep.mubr.f32.mxu0 0.0
        %616 = vmatmul.mubr.f32.gmra.mrb[0].mxu0 %v345
        %v617 = vpop.f32.mrb[0].mxu0
        %v618 = vadd.f32 %v388, %v617
        %v619 = vpop.f32.mrb[0].mxu0
        %v620 = vadd.f32 %v392, %v619
        %621 = vmatprep.mubr.f32.mxu0 0.0
        %622 = vmatmul.mubr.f32.gmra.mrb[0].mxu0 %v346
        %v623 = vpop.f32.mrb[0].mxu0
        %v624 = vadd.f32 %v388, %v623
        %v625 = vpop.f32.mrb[0].mxu0
        %v626 = vadd.f32 %v392, %v625
        %627 = vmatprep.mubr.f32.mxu0 0.0
        %628 = vmatmul.mubr.f32.gmra.mrb[0].mxu0 %v347
        %v629 = vpop.f32.mrb[0].mxu0
        %v630 = vadd.f32 %v388, %v629
        %v631 = vpop.f32.mrb[0].mxu0
        %v632 = vadd.f32 %v392, %v631
        %633 = vmatprep.mubr.f32.mxu0 0.0
        %634 = vmatmul.mubr.f32.gmra.mrb[0].mxu0 %v348
        %v635 = vpop.f32.mrb[0].mxu0
        %v636 = vadd.f32 %v388, %v635
        %v637 = vpop.f32.mrb[0].mxu0
        %v638 = vadd.f32 %v392, %v637
        %639 = vmatprep.mubr.f32.mxu0 0.0
        %640 = vmatmul.mubr.f32.gmra.mrb[0].mxu0 %v349
        %v641 = vpop.f32.mrb[0].mxu0
        %v642 = vadd.f32 %v388, %v641
        %v643 = vpop.f32.mrb[0].mxu0
        %v644 = vadd.f32 %v392, %v643
        %645 = vmatprep.mubr.f32.mxu0 0.0
        %646 = vmatmul.mubr.f32.gmra.mrb[0].mxu0 %v350
        %v647 = vpop.f32.mrb[0].mxu0
        %v648 = vadd.f32 %v388, %v647
        %v649 = vpop.f32.mrb[0].mxu0
        %v650 = vadd.f32 %v392, %v649
        %651 = vdwg.mxu0
        %v652 = vmax.f32 %v462, 0.0
        %v653 = vmax.f32 %v464, 0.0
        %v654 = vmax.f32 %v468, 0.0
        %v655 = vmax.f32 %v470, 0.0
        %v656 = vmax.f32 %v474, 0.0
        %v657 = vmax.f32 %v476, 0.0
        %v658 = vmax.f32 %v480, 0.0
        %v659 = vmax.f32 %v482, 0.0
        %v660 = vmax.f32 %v486, 0.0
        %v661 = vmax.f32 %v488, 0.0
        %v662 = vmax.f32 %v492, 0.0
        %v663 = vmax.f32 %v494, 0.0
        %v664 = vmax.f32 %v498, 0.0
        %v665 = vmax.f32 %v500, 0.0
        %v666 = vmax.f32 %v504, 0.0
        %v667 = vmax.f32 %v506, 0.0
        %v668 = vmax.f32 %v510, 0.0
        %v669 = vmax.f32 %v512, 0.0
        %v670 = vmax.f32 %v516, 0.0
        %v671 = vmax.f32 %v518, 0.0
        %v672 = vmax.f32 %v522, 0.0
        %v673 = vmax.f32 %v524, 0.0
        %v674 = vmax.f32 %v528, 0.0
        %v675 = vmax.f32 %v530, 0.0
        %v676 = vmax.f32 %v534, 0.0
        %v677 = vmax.f32 %v536, 0.0
        %v678 = vmax.f32 %v540, 0.0
        %v679 = vmax.f32 %v542, 0.0
        %v680 = vmax.f32 %v546, 0.0
        %v681 = vmax.f32 %v548, 0.0
        %v682 = vmax.f32 %v552, 0.0
        %v683 = vmax.f32 %v554, 0.0
        %v684 = vmax.f32 %v558, 0.0
        %v685 = vmax.f32 %v560, 0.0
        %v686 = vmax.f32 %v564, 0.0
        %v687 = vmax.f32 %v566, 0.0
        %v688 = vmax.f32 %v570, 0.0
        %v689 = vmax.f32 %v572, 0.0
        %v690 = vmax.f32 %v576, 0.0
        %v691 = vmax.f32 %v578, 0.0
        %v692 = vmax.f32 %v582, 0.0
        %v693 = vmax.f32 %v584, 0.0
        %v694 = vmax.f32 %v588, 0.0
        %v695 = vmax.f32 %v590, 0.0
        %v696 = vmax.f32 %v594, 0.0
        %v697 = vmax.f32 %v596, 0.0
        %v698 = vmax.f32 %v600, 0.0
        %v699 = vmax.f32 %v602, 0.0
        %v700 = vmax.f32 %v606, 0.0
        %v701 = vmax.f32 %v608, 0.0
        %v702 = vmax.f32 %v612, 0.0
        %v703 = vmax.f32 %v614, 0.0
        %v704 = vmax.f32 %v618, 0.0
        %v705 = vmax.f32 %v620, 0.0
        %v706 = vmax.f32 %v624, 0.0
        %v707 = vmax.f32 %v626, 0.0
        %v708 = vmax.f32 %v630, 0.0
        %v709 = vmax.f32 %v632, 0.0
        %v710 = vmax.f32 %v636, 0.0
        %v711 = vmax.f32 %v638, 0.0
        %v712 = vmax.f32 %v642, 0.0
        %v713 = vmax.f32 %v644, 0.0
        %v714 = vmax.f32 %v648, 0.0
        %v715 = vmax.f32 %v650, 0.0
        %v716 = vld [vmem:[%s3] sm:$0xff]
        %v717 = vld [vmem:[%s3 + $0x8] sm:$0xff]
        %v718 = vld [vmem:[%s3 + $0x10] sm:$0xff]
        %v719 = vld [vmem:[%s3 + $0x18] sm:$0xff]
        %v720 = vld [vmem:[%s3 + $0x20] sm:$0xff]
        %v721 = vld [vmem:[%s3 + $0x28] sm:$0xff]
        %v722 = vld [vmem:[%s3 + $0x30] sm:$0xff]
        %v723 = vld [vmem:[%s3 + $0x38] sm:$0xff]
        %v724 = vld [vmem:[%s3 + $0x40] sm:$0xff]
        %v725 = vld [vmem:[%s3 + $0x48] sm:$0xff]
        %v726 = vld [vmem:[%s3 + $0x50] sm:$0xff]
        %v727 = vld [vmem:[%s3 + $0x58] sm:$0xff]
        %v728 = vld [vmem:[%s3 + $0x60] sm:$0xff]
        %v729 = vld [vmem:[%s3 + $0x68] sm:$0xff]
        %v730 = vld [vmem:[%s3 + $0x70] sm:$0xff]
        %v731 = vld [vmem:[%s3 + $0x78] sm:$0xff]
        %v732 = vld [vmem:[%s3 + $0x80] sm:$0xff]
        %v733 = vld [vmem:[%s3 + $0x88] sm:$0xff]
        %v734 = vld [vmem:[%s3 + $0x90] sm:$0xff]
        %v735 = vld [vmem:[%s3 + $0x98] sm:$0xff]
        %v736 = vld [vmem:[%s3 + $0xa0] sm:$0xff]
        %v737 = vld [vmem:[%s3 + $0xa8] sm:$0xff]
        %v738 = vld [vmem:[%s3 + $0xb0] sm:$0xff]
        %v739 = vld [vmem:[%s3 + $0xb8] sm:$0xff]
        %v740 = vld [vmem:[%s3 + $0xc0] sm:$0xff]
        %v741 = vld [vmem:[%s3 + $0xc8] sm:$0xff]
        %v742 = vld [vmem:[%s3 + $0xd0] sm:$0xff]
        %v743 = vld [vmem:[%s3 + $0xd8] sm:$0xff]
        %v744 = vld [vmem:[%s3 + $0xe0] sm:$0xff]
        %v745 = vld [vmem:[%s3 + $0xe8] sm:$0xff]
        %v746 = vld [vmem:[%s3 + $0xf0] sm:$0xff]
        %v747 = vld [vmem:[%s3 + $0xf8] sm:$0xff]
        %v748 = vld [vmem:[%s3 + $0x100] sm:$0xff]
        %v749 = vld [vmem:[%s3 + $0x108] sm:$0xff]
        %v750 = vld [vmem:[%s3 + $0x110] sm:$0xff]
        %v751 = vld [vmem:[%s3 + $0x118] sm:$0xff]
        %v752 = vld [vmem:[%s3 + $0x120] sm:$0xff]
        %v753 = vld [vmem:[%s3 + $0x128] sm:$0xff]
        %v754 = vld [vmem:[%s3 + $0x130] sm:$0xff]
        %v755 = vld [vmem:[%s3 + $0x138] sm:$0xff]
        %v756 = vld [vmem:[%s3 + $0x140] sm:$0xff]
        %v757 = vld [vmem:[%s3 + $0x148] sm:$0xff]
        %v758 = vld [vmem:[%s3 + $0x150] sm:$0xff]
        %v759 = vld [vmem:[%s3 + $0x158] sm:$0xff]
        %v760 = vld [vmem:[%s3 + $0x160] sm:$0xff]
        %v761 = vld [vmem:[%s3 + $0x168] sm:$0xff]
        %v762 = vld [vmem:[%s3 + $0x170] sm:$0xff]
        %v763 = vld [vmem:[%s3 + $0x178] sm:$0xff]
        %v764 = vld [vmem:[%s3 + $0x180] sm:$0xff]
        %v765 = vld [vmem:[%s3 + $0x188] sm:$0xff]
        %v766 = vld [vmem:[%s3 + $0x190] sm:$0xff]
        %v767 = vld [vmem:[%s3 + $0x198] sm:$0xff]
        %v768 = vld [vmem:[%s3 + $0x1a0] sm:$0xff]
        %v769 = vld [vmem:[%s3 + $0x1a8] sm:$0xff]
        %v770 = vld [vmem:[%s3 + $0x1b0] sm:$0xff]
        %v771 = vld [vmem:[%s3 + $0x1b8] sm:$0xff]
        %v772 = vld [vmem:[%s3 + $0x1c0] sm:$0xff]
        %v773 = vld [vmem:[%s3 + $0x1c8] sm:$0xff]
        %v774 = vld [vmem:[%s3 + $0x1d0] sm:$0xff]
        %v775 = vld [vmem:[%s3 + $0x1d8] sm:$0xff]
        %v776 = vld [vmem:[%s3 + $0x1e0] sm:$0xff]
        %v777 = vld [vmem:[%s3 + $0x1e8] sm:$0xff]
        %v778 = vld [vmem:[%s3 + $0x1f0] sm:$0xff]
        %v779 = vld [vmem:[%s3 + $0x1f8] sm:$0xff]
        %v780 = vld [vmem:[%s4] sm:$0x3]
        %v782 = vlaneseq
        %v783 = vshrl.u32 %v782, 7
        %v784 = vsub.s32 0, %v783
        %v785 = vrot.slane %v780, %v784
        %v786 = vlaneseq
        %v787 = vshrl.u32 %v786, 7
        %v788 = vsub.s32 1, %v787
        %v789 = vrot.slane %v780, %v788
        %792 = vmatprep.subr.mxu0 %v717
        %793 = vmatpush1.msra.mxu0 %v716
        %794 = vmatprep.subr.mxu0 %v719
        %795 = vmatpush1.msra.mxu0 %v718
        %796 = vmatprep.subr.mxu0 %v721
        %797 = vmatpush1.msra.mxu0 %v720
        %798 = vmatprep.subr.mxu0 %v723
        %799 = vmatpush1.msra.mxu0 %v722
        %800 = vmatprep.subr.mxu0 %v725
        %801 = vmatpush1.msra.mxu0 %v724
        %802 = vmatprep.subr.mxu0 %v727
        %803 = vmatpush1.msra.mxu0 %v726
        %804 = vmatprep.subr.mxu0 %v729
        %805 = vmatpush1.msra.mxu0 %v728
        %806 = vmatprep.subr.mxu0 %v731
        %807 = vmatpush1.msra.mxu0 %v730
        %808 = vmatprep.subr.mxu0 %v733
        %809 = vmatpush1.msra.mxu0 %v732
        %810 = vmatprep.subr.mxu0 %v735
        %811 = vmatpush1.msra.mxu0 %v734
        %812 = vmatprep.subr.mxu0 %v737
        %813 = vmatpush1.msra.mxu0 %v736
        %814 = vmatprep.subr.mxu0 %v739
        %815 = vmatpush1.msra.mxu0 %v738
        %816 = vmatprep.subr.mxu0 %v741
        %817 = vmatpush1.msra.mxu0 %v740
        %818 = vmatprep.subr.mxu0 %v743
        %819 = vmatpush1.msra.mxu0 %v742
        %820 = vmatprep.subr.mxu0 %v745
        %821 = vmatpush1.msra.mxu0 %v744
        %822 = vmatprep.subr.mxu0 %v747
        %823 = vmatpush1.msra.mxu0 %v746
        %824 = vmatprep.subr.mxu0 %v749
        %825 = vmatpush1.msra.mxu0 %v748
        %826 = vmatprep.subr.mxu0 %v751
        %827 = vmatpush1.msra.mxu0 %v750
        %828 = vmatprep.subr.mxu0 %v753
        %829 = vmatpush1.msra.mxu0 %v752
        %830 = vmatprep.subr.mxu0 %v755
        %831 = vmatpush1.msra.mxu0 %v754
        %832 = vmatprep.subr.mxu0 %v757
        %833 = vmatpush1.msra.mxu0 %v756
        %834 = vmatprep.subr.mxu0 %v759
        %835 = vmatpush1.msra.mxu0 %v758
        %836 = vmatprep.subr.mxu0 %v761
        %837 = vmatpush1.msra.mxu0 %v760
        %838 = vmatprep.subr.mxu0 %v763
        %839 = vmatpush1.msra.mxu0 %v762
        %840 = vmatprep.subr.mxu0 %v765
        %841 = vmatpush1.msra.mxu0 %v764
        %842 = vmatprep.subr.mxu0 %v767
        %843 = vmatpush1.msra.mxu0 %v766
        %844 = vmatprep.subr.mxu0 %v769
        %845 = vmatpush1.msra.mxu0 %v768
        %846 = vmatprep.subr.mxu0 %v771
        %847 = vmatpush1.msra.mxu0 %v770
        %848 = vmatprep.subr.mxu0 %v773
        %849 = vmatpush1.msra.mxu0 %v772
        %850 = vmatprep.subr.mxu0 %v775
        %851 = vmatpush1.msra.mxu0 %v774
        %852 = vmatprep.subr.mxu0 %v777
        %853 = vmatpush1.msra.mxu0 %v776
        %854 = vmatprep.subr.mxu0 %v779
        %855 = vmatpush1.msra.mxu0 %v778
        %856 = vmatprep.mubr.f32.mxu0 %v653
        %857 = vmatmul.mubr.f32.gmra.mrb[0].mxu0 %v652
        %v858 = vpop.f32.mrb[0].mxu0
        %v859 = vadd.f32 %v785, %v858
        %v860 = vpop.f32.mrb[0].mxu0
        %v861 = vadd.f32 %v789, %v860
        %862 = vmatprep.mubr.f32.mxu0 %v655
        %863 = vmatmul.mubr.f32.gmra.mrb[0].mxu0 %v654
        %v864 = vpop.f32.mrb[0].mxu0
        %v865 = vadd.f32 %v785, %v864
        %v866 = vpop.f32.mrb[0].mxu0
        %v867 = vadd.f32 %v789, %v866
        %868 = vmatprep.mubr.f32.mxu0 %v657
        %869 = vmatmul.mubr.f32.gmra.mrb[0].mxu0 %v656
        %v870 = vpop.f32.mrb[0].mxu0
        %v871 = vadd.f32 %v785, %v870
        %v872 = vpop.f32.mrb[0].mxu0
        %v873 = vadd.f32 %v789, %v872
        %874 = vmatprep.mubr.f32.mxu0 %v659
        %875 = vmatmul.mubr.f32.gmra.mrb[0].mxu0 %v658
        %v876 = vpop.f32.mrb[0].mxu0
        %v877 = vadd.f32 %v785, %v876
        %v878 = vpop.f32.mrb[0].mxu0
        %v879 = vadd.f32 %v789, %v878
        %880 = vmatprep.mubr.f32.mxu0 %v661
        %881 = vmatmul.mubr.f32.gmra.mrb[0].mxu0 %v660
        %v882 = vpop.f32.mrb[0].mxu0
        %v883 = vadd.f32 %v785, %v882
        %v884 = vpop.f32.mrb[0].mxu0
        %v885 = vadd.f32 %v789, %v884
        %886 = vmatprep.mubr.f32.mxu0 %v663
        %887 = vmatmul.mubr.f32.gmra.mrb[0].mxu0 %v662
        %v888 = vpop.f32.mrb[0].mxu0
        %v889 = vadd.f32 %v785, %v888
        %v890 = vpop.f32.mrb[0].mxu0
        %v891 = vadd.f32 %v789, %v890
        %892 = vmatprep.mubr.f32.mxu0 %v665
        %893 = vmatmul.mubr.f32.gmra.mrb[0].mxu0 %v664
        %v894 = vpop.f32.mrb[0].mxu0
        %v895 = vadd.f32 %v785, %v894
        %v896 = vpop.f32.mrb[0].mxu0
        %v897 = vadd.f32 %v789, %v896
        %898 = vmatprep.mubr.f32.mxu0 %v667
        %899 = vmatmul.mubr.f32.gmra.mrb[0].mxu0 %v666
        %v900 = vpop.f32.mrb[0].mxu0
        %v901 = vadd.f32 %v785, %v900
        %v902 = vpop.f32.mrb[0].mxu0
        %v903 = vadd.f32 %v789, %v902
        %904 = vmatprep.mubr.f32.mxu0 %v669
        %905 = vmatmul.mubr.f32.gmra.mrb[0].mxu0 %v668
        %v906 = vpop.f32.mrb[0].mxu0
        %v907 = vadd.f32 %v785, %v906
        %v908 = vpop.f32.mrb[0].mxu0
        %v909 = vadd.f32 %v789, %v908
        %910 = vmatprep.mubr.f32.mxu0 %v671
        %911 = vmatmul.mubr.f32.gmra.mrb[0].mxu0 %v670
        %v912 = vpop.f32.mrb[0].mxu0
        %v913 = vadd.f32 %v785, %v912
        %v914 = vpop.f32.mrb[0].mxu0
        %v915 = vadd.f32 %v789, %v914
        %916 = vmatprep.mubr.f32.mxu0 %v673
        %917 = vmatmul.mubr.f32.gmra.mrb[0].mxu0 %v672
        %v918 = vpop.f32.mrb[0].mxu0
        %v919 = vadd.f32 %v785, %v918
        %v920 = vpop.f32.mrb[0].mxu0
        %v921 = vadd.f32 %v789, %v920
        %922 = vmatprep.mubr.f32.mxu0 %v675
        %923 = vmatmul.mubr.f32.gmra.mrb[0].mxu0 %v674
        %v924 = vpop.f32.mrb[0].mxu0
        %v925 = vadd.f32 %v785, %v924
        %v926 = vpop.f32.mrb[0].mxu0
        %v927 = vadd.f32 %v789, %v926
        %928 = vmatprep.mubr.f32.mxu0 %v677
        %929 = vmatmul.mubr.f32.gmra.mrb[0].mxu0 %v676
        %v930 = vpop.f32.mrb[0].mxu0
        %v931 = vadd.f32 %v785, %v930
        %v932 = vpop.f32.mrb[0].mxu0
        %v933 = vadd.f32 %v789, %v932
        %934 = vmatprep.mubr.f32.mxu0 %v679
        %935 = vmatmul.mubr.f32.gmra.mrb[0].mxu0 %v678
        %v936 = vpop.f32.mrb[0].mxu0
        %v937 = vadd.f32 %v785, %v936
        %v938 = vpop.f32.mrb[0].mxu0
        %v939 = vadd.f32 %v789, %v938
        %940 = vmatprep.mubr.f32.mxu0 %v681
        %941 = vmatmul.mubr.f32.gmra.mrb[0].mxu0 %v680
        %v942 = vpop.f32.mrb[0].mxu0
        %v943 = vadd.f32 %v785, %v942
        %v944 = vpop.f32.mrb[0].mxu0
        %v945 = vadd.f32 %v789, %v944
        %946 = vmatprep.mubr.f32.mxu0 %v683
        %947 = vmatmul.mubr.f32.gmra.mrb[0].mxu0 %v682
        %v948 = vpop.f32.mrb[0].mxu0
        %v949 = vadd.f32 %v785, %v948
        %v950 = vpop.f32.mrb[0].mxu0
        %v951 = vadd.f32 %v789, %v950
        %952 = vmatprep.mubr.f32.mxu0 %v685
        %953 = vmatmul.mubr.f32.gmra.mrb[0].mxu0 %v684
        %v954 = vpop.f32.mrb[0].mxu0
        %v955 = vadd.f32 %v785, %v954
        %v956 = vpop.f32.mrb[0].mxu0
        %v957 = vadd.f32 %v789, %v956
        %958 = vmatprep.mubr.f32.mxu0 %v687
        %959 = vmatmul.mubr.f32.gmra.mrb[0].mxu0 %v686
        %v960 = vpop.f32.mrb[0].mxu0
        %v961 = vadd.f32 %v785, %v960
        %v962 = vpop.f32.mrb[0].mxu0
        %v963 = vadd.f32 %v789, %v962
        %964 = vmatprep.mubr.f32.mxu0 %v689
        %965 = vmatmul.mubr.f32.gmra.mrb[0].mxu0 %v688
        %v966 = vpop.f32.mrb[0].mxu0
        %v967 = vadd.f32 %v785, %v966
        %v968 = vpop.f32.mrb[0].mxu0
        %v969 = vadd.f32 %v789, %v968
        %970 = vmatprep.mubr.f32.mxu0 %v691
        %971 = vmatmul.mubr.f32.gmra.mrb[0].mxu0 %v690
        %v972 = vpop.f32.mrb[0].mxu0
        %v973 = vadd.f32 %v785, %v972
        %v974 = vpop.f32.mrb[0].mxu0
        %v975 = vadd.f32 %v789, %v974
        %976 = vmatprep.mubr.f32.mxu0 %v693
        %977 = vmatmul.mubr.f32.gmra.mrb[0].mxu0 %v692
        %v978 = vpop.f32.mrb[0].mxu0
        %v979 = vadd.f32 %v785, %v978
        %v980 = vpop.f32.mrb[0].mxu0
        %v981 = vadd.f32 %v789, %v980
        %982 = vmatprep.mubr.f32.mxu0 %v695
        %983 = vmatmul.mubr.f32.gmra.mrb[0].mxu0 %v694
        %v984 = vpop.f32.mrb[0].mxu0
        %v985 = vadd.f32 %v785, %v984
        %v986 = vpop.f32.mrb[0].mxu0
        %v987 = vadd.f32 %v789, %v986
        %988 = vmatprep.mubr.f32.mxu0 %v697
        %989 = vmatmul.mubr.f32.gmra.mrb[0].mxu0 %v696
        %v990 = vpop.f32.mrb[0].mxu0
        %v991 = vadd.f32 %v785, %v990
        %v992 = vpop.f32.mrb[0].mxu0
        %v993 = vadd.f32 %v789, %v992
        %994 = vmatprep.mubr.f32.mxu0 %v699
        %995 = vmatmul.mubr.f32.gmra.mrb[0].mxu0 %v698
        %v996 = vpop.f32.mrb[0].mxu0
        %v997 = vadd.f32 %v785, %v996
        %v998 = vpop.f32.mrb[0].mxu0
        %v999 = vadd.f32 %v789, %v998
        %1000 = vmatprep.mubr.f32.mxu0 %v701
        %1001 = vmatmul.mubr.f32.gmra.mrb[0].mxu0 %v700
        %v1002 = vpop.f32.mrb[0].mxu0
        %v1003 = vadd.f32 %v785, %v1002
        %v1004 = vpop.f32.mrb[0].mxu0
        %v1005 = vadd.f32 %v789, %v1004
        %1006 = vmatprep.mubr.f32.mxu0 %v703
        %1007 = vmatmul.mubr.f32.gmra.mrb[0].mxu0 %v702
        %v1008 = vpop.f32.mrb[0].mxu0
        %v1009 = vadd.f32 %v785, %v1008
        %v1010 = vpop.f32.mrb[0].mxu0
        %v1011 = vadd.f32 %v789, %v1010
        %1012 = vmatprep.mubr.f32.mxu0 %v705
        %1013 = vmatmul.mubr.f32.gmra.mrb[0].mxu0 %v704
        %v1014 = vpop.f32.mrb[0].mxu0
        %v1015 = vadd.f32 %v785, %v1014
        %v1016 = vpop.f32.mrb[0].mxu0
        %v1017 = vadd.f32 %v789, %v1016
        %1018 = vmatprep.mubr.f32.mxu0 %v707
        %1019 = vmatmul.mubr.f32.gmra.mrb[0].mxu0 %v706
        %v1020 = vpop.f32.mrb[0].mxu0
        %v1021 = vadd.f32 %v785, %v1020
        %v1022 = vpop.f32.mrb[0].mxu0
        %v1023 = vadd.f32 %v789, %v1022
        %1024 = vmatprep.mubr.f32.mxu0 %v709
        %1025 = vmatmul.mubr.f32.gmra.mrb[0].mxu0 %v708
        %v1026 = vpop.f32.mrb[0].mxu0
        %v1027 = vadd.f32 %v785, %v1026
        %v1028 = vpop.f32.mrb[0].mxu0
        %v1029 = vadd.f32 %v789, %v1028
        %1030 = vmatprep.mubr.f32.mxu0 %v711
        %1031 = vmatmul.mubr.f32.gmra.mrb[0].mxu0 %v710
        %v1032 = vpop.f32.mrb[0].mxu0
        %v1033 = vadd.f32 %v785, %v1032
        %v1034 = vpop.f32.mrb[0].mxu0
        %v1035 = vadd.f32 %v789, %v1034
        %1036 = vmatprep.mubr.f32.mxu0 %v713
        %1037 = vmatmul.mubr.f32.gmra.mrb[0].mxu0 %v712
        %v1038 = vpop.f32.mrb[0].mxu0
        %v1039 = vadd.f32 %v785, %v1038
        %v1040 = vpop.f32.mrb[0].mxu0
        %v1041 = vadd.f32 %v789, %v1040
        %1042 = vmatprep.mubr.f32.mxu0 %v715
        %1043 = vmatmul.mubr.f32.gmra.mrb[0].mxu0 %v714
        %v1044 = vpop.f32.mrb[0].mxu0
        %v1045 = vadd.f32 %v785, %v1044
        %v1046 = vpop.f32.mrb[0].mxu0
        %v1047 = vadd.f32 %v789, %v1046
        %1048 = vdwg.mxu0
        %v1049 = vmax.f32 %v859, 0.0
        %v1050 = vmax.f32 %v861, 0.0
        %v1051 = vmax.f32 %v865, 0.0
        %v1052 = vmax.f32 %v867, 0.0
        %v1053 = vmax.f32 %v871, 0.0
        %v1054 = vmax.f32 %v873, 0.0
        %v1055 = vmax.f32 %v877, 0.0
        %v1056 = vmax.f32 %v879, 0.0
        %v1057 = vmax.f32 %v883, 0.0
        %v1058 = vmax.f32 %v885, 0.0
        %v1059 = vmax.f32 %v889, 0.0
        %v1060 = vmax.f32 %v891, 0.0
        %v1061 = vmax.f32 %v895, 0.0
        %v1062 = vmax.f32 %v897, 0.0
        %v1063 = vmax.f32 %v901, 0.0
        %v1064 = vmax.f32 %v903, 0.0
        %v1065 = vmax.f32 %v907, 0.0
        %v1066 = vmax.f32 %v909, 0.0
        %v1067 = vmax.f32 %v913, 0.0
        %v1068 = vmax.f32 %v915, 0.0
        %v1069 = vmax.f32 %v919, 0.0
        %v1070 = vmax.f32 %v921, 0.0
        %v1071 = vmax.f32 %v925, 0.0
        %v1072 = vmax.f32 %v927, 0.0
        %v1073 = vmax.f32 %v931, 0.0
        %v1074 = vmax.f32 %v933, 0.0
        %v1075 = vmax.f32 %v937, 0.0
        %v1076 = vmax.f32 %v939, 0.0
        %v1077 = vmax.f32 %v943, 0.0
        %v1078 = vmax.f32 %v945, 0.0
        %v1079 = vmax.f32 %v949, 0.0
        %v1080 = vmax.f32 %v951, 0.0
        %v1081 = vmax.f32 %v955, 0.0
        %v1082 = vmax.f32 %v957, 0.0
        %v1083 = vmax.f32 %v961, 0.0
        %v1084 = vmax.f32 %v963, 0.0
        %v1085 = vmax.f32 %v967, 0.0
        %v1086 = vmax.f32 %v969, 0.0
        %v1087 = vmax.f32 %v973, 0.0
        %v1088 = vmax.f32 %v975, 0.0
        %v1089 = vmax.f32 %v979, 0.0
        %v1090 = vmax.f32 %v981, 0.0
        %v1091 = vmax.f32 %v985, 0.0
        %v1092 = vmax.f32 %v987, 0.0
        %v1093 = vmax.f32 %v991, 0.0
        %v1094 = vmax.f32 %v993, 0.0
        %v1095 = vmax.f32 %v997, 0.0
        %v1096 = vmax.f32 %v999, 0.0
        %v1097 = vmax.f32 %v1003, 0.0
        %v1098 = vmax.f32 %v1005, 0.0
        %v1099 = vmax.f32 %v1009, 0.0
        %v1100 = vmax.f32 %v1011, 0.0
        %v1101 = vmax.f32 %v1015, 0.0
        %v1102 = vmax.f32 %v1017, 0.0
        %v1103 = vmax.f32 %v1021, 0.0
        %v1104 = vmax.f32 %v1023, 0.0
        %v1105 = vmax.f32 %v1027, 0.0
        %v1106 = vmax.f32 %v1029, 0.0
        %v1107 = vmax.f32 %v1033, 0.0
        %v1108 = vmax.f32 %v1035, 0.0
        %v1109 = vmax.f32 %v1039, 0.0
        %v1110 = vmax.f32 %v1041, 0.0
        %v1111 = vmax.f32 %v1045, 0.0
        %v1112 = vmax.f32 %v1047, 0.0
        %v1113 = vld [vmem:[%s5] sm:$0xff]
        %v1114 = vld [vmem:[%s5 + $0x8] sm:$0xff]
        %v1115 = vld [vmem:[%s5 + $0x10] sm:$0xff]
        %v1116 = vld [vmem:[%s5 + $0x18] sm:$0xff]
        %v1117 = vld [vmem:[%s5 + $0x20] sm:$0xff]
        %v1118 = vld [vmem:[%s5 + $0x28] sm:$0xff]
        %v1119 = vld [vmem:[%s5 + $0x30] sm:$0xff]
        %v1120 = vld [vmem:[%s5 + $0x38] sm:$0xff]
        %v1121 = vld [vmem:[%s5 + $0x40] sm:$0xff]
        %v1122 = vld [vmem:[%s5 + $0x48] sm:$0xff]
        %v1123 = vld [vmem:[%s5 + $0x50] sm:$0xff]
        %v1124 = vld [vmem:[%s5 + $0x58] sm:$0xff]
        %v1125 = vld [vmem:[%s5 + $0x60] sm:$0xff]
        %v1126 = vld [vmem:[%s5 + $0x68] sm:$0xff]
        %v1127 = vld [vmem:[%s5 + $0x70] sm:$0xff]
        %v1128 = vld [vmem:[%s5 + $0x78] sm:$0xff]
        %v1129 = vld [vmem:[%s5 + $0x80] sm:$0xff]
        %v1130 = vld [vmem:[%s5 + $0x88] sm:$0xff]
        %v1131 = vld [vmem:[%s5 + $0x90] sm:$0xff]
        %v1132 = vld [vmem:[%s5 + $0x98] sm:$0xff]
        %v1133 = vld [vmem:[%s5 + $0xa0] sm:$0xff]
        %v1134 = vld [vmem:[%s5 + $0xa8] sm:$0xff]
        %v1135 = vld [vmem:[%s5 + $0xb0] sm:$0xff]
        %v1136 = vld [vmem:[%s5 + $0xb8] sm:$0xff]
        %v1137 = vld [vmem:[%s5 + $0xc0] sm:$0xff]
        %v1138 = vld [vmem:[%s5 + $0xc8] sm:$0xff]
        %v1139 = vld [vmem:[%s5 + $0xd0] sm:$0xff]
        %v1140 = vld [vmem:[%s5 + $0xd8] sm:$0xff]
        %v1141 = vld [vmem:[%s5 + $0xe0] sm:$0xff]
        %v1142 = vld [vmem:[%s5 + $0xe8] sm:$0xff]
        %v1143 = vld [vmem:[%s5 + $0xf0] sm:$0xff]
        %v1144 = vld [vmem:[%s5 + $0xf8] sm:$0xff]
        %v1145 = vld [vmem:[%s6] sm:$0x1]
        %v1147 = vlaneseq
        %v1148 = vshrl.u32 %v1147, 7
        %v1149 = vsub.s32 0, %v1148
        %v1150 = vrot.slane %v1145, %v1149
        %1152 = vmatprep.subr.mxu0 0.0
        %1153 = vmatpush1.msra.mxu0 %v1113
        %1154 = vmatprep.subr.mxu0 0.0
        %1155 = vmatpush1.msra.mxu0 %v1114
        %1156 = vmatprep.subr.mxu0 0.0
        %1157 = vmatpush1.msra.mxu0 %v1115
        %1158 = vmatprep.subr.mxu0 0.0
        %1159 = vmatpush1.msra.mxu0 %v1116
        %1160 = vmatprep.subr.mxu0 0.0
        %1161 = vmatpush1.msra.mxu0 %v1117
        %1162 = vmatprep.subr.mxu0 0.0
        %1163 = vmatpush1.msra.mxu0 %v1118
        %1164 = vmatprep.subr.mxu0 0.0
        %1165 = vmatpush1.msra.mxu0 %v1119
        %1166 = vmatprep.subr.mxu0 0.0
        %1167 = vmatpush1.msra.mxu0 %v1120
        %1168 = vmatprep.subr.mxu0 0.0
        %1169 = vmatpush1.msra.mxu0 %v1121
        %1170 = vmatprep.subr.mxu0 0.0
        %1171 = vmatpush1.msra.mxu0 %v1122
        %1172 = vmatprep.subr.mxu0 0.0
        %1173 = vmatpush1.msra.mxu0 %v1123
        %1174 = vmatprep.subr.mxu0 0.0
        %1175 = vmatpush1.msra.mxu0 %v1124
        %1176 = vmatprep.subr.mxu0 0.0
        %1177 = vmatpush1.msra.mxu0 %v1125
        %1178 = vmatprep.subr.mxu0 0.0
        %1179 = vmatpush1.msra.mxu0 %v1126
        %1180 = vmatprep.subr.mxu0 0.0
        %1181 = vmatpush1.msra.mxu0 %v1127
        %1182 = vmatprep.subr.mxu0 0.0
        %1183 = vmatpush1.msra.mxu0 %v1128
        %1184 = vmatprep.subr.mxu0 0.0
        %1185 = vmatpush1.msra.mxu0 %v1129
        %1186 = vmatprep.subr.mxu0 0.0
        %1187 = vmatpush1.msra.mxu0 %v1130
        %1188 = vmatprep.subr.mxu0 0.0
        %1189 = vmatpush1.msra.mxu0 %v1131
        %1190 = vmatprep.subr.mxu0 0.0
        %1191 = vmatpush1.msra.mxu0 %v1132
        %1192 = vmatprep.subr.mxu0 0.0
        %1193 = vmatpush1.msra.mxu0 %v1133
        %1194 = vmatprep.subr.mxu0 0.0
        %1195 = vmatpush1.msra.mxu0 %v1134
        %1196 = vmatprep.subr.mxu0 0.0
        %1197 = vmatpush1.msra.mxu0 %v1135
        %1198 = vmatprep.subr.mxu0 0.0
        %1199 = vmatpush1.msra.mxu0 %v1136
        %1200 = vmatprep.subr.mxu0 0.0
        %1201 = vmatpush1.msra.mxu0 %v1137
        %1202 = vmatprep.subr.mxu0 0.0
        %1203 = vmatpush1.msra.mxu0 %v1138
        %1204 = vmatprep.subr.mxu0 0.0
        %1205 = vmatpush1.msra.mxu0 %v1139
        %1206 = vmatprep.subr.mxu0 0.0
        %1207 = vmatpush1.msra.mxu0 %v1140
        %1208 = vmatprep.subr.mxu0 0.0
        %1209 = vmatpush1.msra.mxu0 %v1141
        %1210 = vmatprep.subr.mxu0 0.0
        %1211 = vmatpush1.msra.mxu0 %v1142
        %1212 = vmatprep.subr.mxu0 0.0
        %1213 = vmatpush1.msra.mxu0 %v1143
        %1214 = vmatprep.subr.mxu0 0.0
        %1215 = vmatpush1.msra.mxu0 %v1144
        %1216 = vmatprep.mubr.f32.mxu0 %v1050
        %1217 = vmatmul.mubr.f32.gmra.mrb[0].mxu0 %v1049
        %v1218 = vpop.f32.mrb[0].mxu0
        %v1219 = vadd.f32 %v1150, %v1218
        %v1220 = vpop.f32.mrb[0].mxu0
        %1221 = vmatprep.mubr.f32.mxu0 %v1052
        %1222 = vmatmul.mubr.f32.gmra.mrb[0].mxu0 %v1051
        %v1223 = vpop.f32.mrb[0].mxu0
        %v1224 = vadd.f32 %v1150, %v1223
        %v1225 = vpop.f32.mrb[0].mxu0
        %1226 = vmatprep.mubr.f32.mxu0 %v1054
        %1227 = vmatmul.mubr.f32.gmra.mrb[0].mxu0 %v1053
        %v1228 = vpop.f32.mrb[0].mxu0
        %v1229 = vadd.f32 %v1150, %v1228
        %v1230 = vpop.f32.mrb[0].mxu0
        %1231 = vmatprep.mubr.f32.mxu0 %v1056
        %1232 = vmatmul.mubr.f32.gmra.mrb[0].mxu0 %v1055
        %v1233 = vpop.f32.mrb[0].mxu0
        %v1234 = vadd.f32 %v1150, %v1233
        %v1235 = vpop.f32.mrb[0].mxu0
        %1236 = vmatprep.mubr.f32.mxu0 %v1058
        %1237 = vmatmul.mubr.f32.gmra.mrb[0].mxu0 %v1057
        %v1238 = vpop.f32.mrb[0].mxu0
        %v1239 = vadd.f32 %v1150, %v1238
        %v1240 = vpop.f32.mrb[0].mxu0
        %1241 = vmatprep.mubr.f32.mxu0 %v1060
        %1242 = vmatmul.mubr.f32.gmra.mrb[0].mxu0 %v1059
        %v1243 = vpop.f32.mrb[0].mxu0
        %v1244 = vadd.f32 %v1150, %v1243
        %v1245 = vpop.f32.mrb[0].mxu0
        %1246 = vmatprep.mubr.f32.mxu0 %v1062
        %1247 = vmatmul.mubr.f32.gmra.mrb[0].mxu0 %v1061
        %v1248 = vpop.f32.mrb[0].mxu0
        %v1249 = vadd.f32 %v1150, %v1248
        %v1250 = vpop.f32.mrb[0].mxu0
        %1251 = vmatprep.mubr.f32.mxu0 %v1064
        %1252 = vmatmul.mubr.f32.gmra.mrb[0].mxu0 %v1063
        %v1253 = vpop.f32.mrb[0].mxu0
        %v1254 = vadd.f32 %v1150, %v1253
        %v1255 = vpop.f32.mrb[0].mxu0
        %1256 = vmatprep.mubr.f32.mxu0 %v1066
        %1257 = vmatmul.mubr.f32.gmra.mrb[0].mxu0 %v1065
        %v1258 = vpop.f32.mrb[0].mxu0
        %v1259 = vadd.f32 %v1150, %v1258
        %v1260 = vpop.f32.mrb[0].mxu0
        %1261 = vmatprep.mubr.f32.mxu0 %v1068
        %1262 = vmatmul.mubr.f32.gmra.mrb[0].mxu0 %v1067
        %v1263 = vpop.f32.mrb[0].mxu0
        %v1264 = vadd.f32 %v1150, %v1263
        %v1265 = vpop.f32.mrb[0].mxu0
        %1266 = vmatprep.mubr.f32.mxu0 %v1070
        %1267 = vmatmul.mubr.f32.gmra.mrb[0].mxu0 %v1069
        %v1268 = vpop.f32.mrb[0].mxu0
        %v1269 = vadd.f32 %v1150, %v1268
        %v1270 = vpop.f32.mrb[0].mxu0
        %1271 = vmatprep.mubr.f32.mxu0 %v1072
        %1272 = vmatmul.mubr.f32.gmra.mrb[0].mxu0 %v1071
        %v1273 = vpop.f32.mrb[0].mxu0
        %v1274 = vadd.f32 %v1150, %v1273
        %v1275 = vpop.f32.mrb[0].mxu0
        %1276 = vmatprep.mubr.f32.mxu0 %v1074
        %1277 = vmatmul.mubr.f32.gmra.mrb[0].mxu0 %v1073
        %v1278 = vpop.f32.mrb[0].mxu0
        %v1279 = vadd.f32 %v1150, %v1278
        %v1280 = vpop.f32.mrb[0].mxu0
        %1281 = vmatprep.mubr.f32.mxu0 %v1076
        %1282 = vmatmul.mubr.f32.gmra.mrb[0].mxu0 %v1075
        %v1283 = vpop.f32.mrb[0].mxu0
        %v1284 = vadd.f32 %v1150, %v1283
        %v1285 = vpop.f32.mrb[0].mxu0
        %1286 = vmatprep.mubr.f32.mxu0 %v1078
        %1287 = vmatmul.mubr.f32.gmra.mrb[0].mxu0 %v1077
        %v1288 = vpop.f32.mrb[0].mxu0
        %v1289 = vadd.f32 %v1150, %v1288
        %v1290 = vpop.f32.mrb[0].mxu0
        %1291 = vmatprep.mubr.f32.mxu0 %v1080
        %1292 = vmatmul.mubr.f32.gmra.mrb[0].mxu0 %v1079
        %v1293 = vpop.f32.mrb[0].mxu0
        %v1294 = vadd.f32 %v1150, %v1293
        %v1295 = vpop.f32.mrb[0].mxu0
        %1296 = vmatprep.mubr.f32.mxu0 %v1082
        %1297 = vmatmul.mubr.f32.gmra.mrb[0].mxu0 %v1081
        %v1298 = vpop.f32.mrb[0].mxu0
        %v1299 = vadd.f32 %v1150, %v1298
        %v1300 = vpop.f32.mrb[0].mxu0
        %1301 = vmatprep.mubr.f32.mxu0 %v1084
        %1302 = vmatmul.mubr.f32.gmra.mrb[0].mxu0 %v1083
        %v1303 = vpop.f32.mrb[0].mxu0
        %v1304 = vadd.f32 %v1150, %v1303
        %v1305 = vpop.f32.mrb[0].mxu0
        %1306 = vmatprep.mubr.f32.mxu0 %v1086
        %1307 = vmatmul.mubr.f32.gmra.mrb[0].mxu0 %v1085
        %v1308 = vpop.f32.mrb[0].mxu0
        %v1309 = vadd.f32 %v1150, %v1308
        %v1310 = vpop.f32.mrb[0].mxu0
        %1311 = vmatprep.mubr.f32.mxu0 %v1088
        %1312 = vmatmul.mubr.f32.gmra.mrb[0].mxu0 %v1087
        %v1313 = vpop.f32.mrb[0].mxu0
        %v1314 = vadd.f32 %v1150, %v1313
        %v1315 = vpop.f32.mrb[0].mxu0
        %1316 = vmatprep.mubr.f32.mxu0 %v1090
        %1317 = vmatmul.mubr.f32.gmra.mrb[0].mxu0 %v1089
        %v1318 = vpop.f32.mrb[0].mxu0
        %v1319 = vadd.f32 %v1150, %v1318
        %v1320 = vpop.f32.mrb[0].mxu0
        %1321 = vmatprep.mubr.f32.mxu0 %v1092
        %1322 = vmatmul.mubr.f32.gmra.mrb[0].mxu0 %v1091
        %v1323 = vpop.f32.mrb[0].mxu0
        %v1324 = vadd.f32 %v1150, %v1323
        %v1325 = vpop.f32.mrb[0].mxu0
        %1326 = vmatprep.mubr.f32.mxu0 %v1094
        %1327 = vmatmul.mubr.f32.gmra.mrb[0].mxu0 %v1093
        %v1328 = vpop.f32.mrb[0].mxu0
        %v1329 = vadd.f32 %v1150, %v1328
        %v1330 = vpop.f32.mrb[0].mxu0
        %1331 = vmatprep.mubr.f32.mxu0 %v1096
        %1332 = vmatmul.mubr.f32.gmra.mrb[0].mxu0 %v1095
        %v1333 = vpop.f32.mrb[0].mxu0
        %v1334 = vadd.f32 %v1150, %v1333
        %v1335 = vpop.f32.mrb[0].mxu0
        %1336 = vmatprep.mubr.f32.mxu0 %v1098
        %1337 = vmatmul.mubr.f32.gmra.mrb[0].mxu0 %v1097
        %v1338 = vpop.f32.mrb[0].mxu0
        %v1339 = vadd.f32 %v1150, %v1338
        %v1340 = vpop.f32.mrb[0].mxu0
        %1341 = vmatprep.mubr.f32.mxu0 %v1100
        %1342 = vmatmul.mubr.f32.gmra.mrb[0].mxu0 %v1099
        %v1343 = vpop.f32.mrb[0].mxu0
        %v1344 = vadd.f32 %v1150, %v1343
        %v1345 = vpop.f32.mrb[0].mxu0
        %1346 = vmatprep.mubr.f32.mxu0 %v1102
        %1347 = vmatmul.mubr.f32.gmra.mrb[0].mxu0 %v1101
        %v1348 = vpop.f32.mrb[0].mxu0
        %v1349 = vadd.f32 %v1150, %v1348
        %v1350 = vpop.f32.mrb[0].mxu0
        %1351 = vmatprep.mubr.f32.mxu0 %v1104
        %1352 = vmatmul.mubr.f32.gmra.mrb[0].mxu0 %v1103
        %v1353 = vpop.f32.mrb[0].mxu0
        %v1354 = vadd.f32 %v1150, %v1353
        %v1355 = vpop.f32.mrb[0].mxu0
        %1356 = vmatprep.mubr.f32.mxu0 %v1106
        %1357 = vmatmul.mubr.f32.gmra.mrb[0].mxu0 %v1105
        %v1358 = vpop.f32.mrb[0].mxu0
        %v1359 = vadd.f32 %v1150, %v1358
        %v1360 = vpop.f32.mrb[0].mxu0
        %1361 = vmatprep.mubr.f32.mxu0 %v1108
        %1362 = vmatmul.mubr.f32.gmra.mrb[0].mxu0 %v1107
        %v1363 = vpop.f32.mrb[0].mxu0
        %v1364 = vadd.f32 %v1150, %v1363
        %v1365 = vpop.f32.mrb[0].mxu0
        %1366 = vmatprep.mubr.f32.mxu0 %v1110
        %1367 = vmatmul.mubr.f32.gmra.mrb[0].mxu0 %v1109
        %v1368 = vpop.f32.mrb[0].mxu0
        %v1369 = vadd.f32 %v1150, %v1368
        %v1370 = vpop.f32.mrb[0].mxu0
        %1371 = vmatprep.mubr.f32.mxu0 %v1112
        %1372 = vmatmul.mubr.f32.gmra.mrb[0].mxu0 %v1111
        %v1373 = vpop.f32.mrb[0].mxu0
        %v1374 = vadd.f32 %v1150, %v1373
        %v1375 = vpop.f32.mrb[0].mxu0
        %1376 = vdwg.mxu0
        %1377 = vst [vmem:[%s299] sm:$0xff] %v1219
        %1378 = vst [vmem:[%s299 + $0x8] sm:$0xff] %v1224
        %1379 = vst [vmem:[%s299 + $0x10] sm:$0xff] %v1229
        %1380 = vst [vmem:[%s299 + $0x18] sm:$0xff] %v1234
        %1381 = vst [vmem:[%s299 + $0x20] sm:$0xff] %v1239
        %1382 = vst [vmem:[%s299 + $0x28] sm:$0xff] %v1244
        %1383 = vst [vmem:[%s299 + $0x30] sm:$0xff] %v1249
        %1384 = vst [vmem:[%s299 + $0x38] sm:$0xff] %v1254
        %1385 = vst [vmem:[%s299 + $0x40] sm:$0xff] %v1259
        %1386 = vst [vmem:[%s299 + $0x48] sm:$0xff] %v1264
        %1387 = vst [vmem:[%s299 + $0x50] sm:$0xff] %v1269
        %1388 = vst [vmem:[%s299 + $0x58] sm:$0xff] %v1274
        %1389 = vst [vmem:[%s299 + $0x60] sm:$0xff] %v1279
        %1390 = vst [vmem:[%s299 + $0x68] sm:$0xff] %v1284
        %1391 = vst [vmem:[%s299 + $0x70] sm:$0xff] %v1289
        %1392 = vst [vmem:[%s299 + $0x78] sm:$0xff] %v1294
        %1393 = vst [vmem:[%s299 + $0x80] sm:$0xff] %v1299
        %1394 = vst [vmem:[%s299 + $0x88] sm:$0xff] %v1304
        %1395 = vst [vmem:[%s299 + $0x90] sm:$0xff] %v1309
        %1396 = vst [vmem:[%s299 + $0x98] sm:$0xff] %v1314
        %1397 = vst [vmem:[%s299 + $0xa0] sm:$0xff] %v1319
        %1398 = vst [vmem:[%s299 + $0xa8] sm:$0xff] %v1324
        %1399 = vst [vmem:[%s299 + $0xb0] sm:$0xff] %v1329
        %1400 = vst [vmem:[%s299 + $0xb8] sm:$0xff] %v1334
        %1401 = vst [vmem:[%s299 + $0xc0] sm:$0xff] %v1339
        %1402 = vst [vmem:[%s299 + $0xc8] sm:$0xff] %v1344
        %1403 = vst [vmem:[%s299 + $0xd0] sm:$0xff] %v1349
        %1404 = vst [vmem:[%s299 + $0xd8] sm:$0xff] %v1354
        %1405 = vst [vmem:[%s299 + $0xe0] sm:$0xff] %v1359
        %1406 = vst [vmem:[%s299 + $0xe8] sm:$0xff] %v1364
        %1407 = vst [vmem:[%s299 + $0xf0] sm:$0xff] %v1369
        %1408 = vst [vmem:[%s299 + $0xf8] sm:$0xff] %v1374
        %s1409 = sand.u32 %s182, 1
        %s1410 = scalar_lea.sflag [#allocation4], %s1409
        %s1411 = sand.u32 %s182, 1
        %s1412 = smul.addr %s1411, 256
        %s1413 = scalar_lea.vmem [#allocation5], %s1412
        // Predicated region
        $region53: #{audio_mlp_forward.1} parent=47 // pred_check
          %p1414 = pneg %p192
        $region54: #{audio_mlp_forward.1} parent=47 // pred_check_branch
          %1416 = sbr.rel (%p1414) target = $region56
        $region55: #{audio_mlp_forward.1} parent=47 // pred_region
          %s1417 = smul.u32 32, %s22
          %s1418 = ssub.s32 48, %s1417
          %p1419 = scmp.lt.s32.totalorder %s1418, 32
          %s1420 = scalar_select %p1419, %s1418, 32
          %s1421 = smul.u32 128, %s1420
          %s1423 = ssub.s32 4096, %s1421
          %1424 = vsyncadd %s1410, %s1423
          %p1425 = scmp.ne.s32.totalorder 0, %s1421
          %s1426 = smul.addr %s1417, 128
          %s1427 = scalar_lea.hbm %s7, %s1426
          %s1428 = smul.u32 8, %s1420
          %s1429 = sshll.u32 %s1413, 4
          %s1430 = int_to_ptr.vmem [resolvable:$true] %s1429
          %s1431 = sshll.u32 %s1428, 4
          %1435 = dma.vmem_to_hbm [thread:$0]  (%p1425), %s1430, %s1431, %s1427, %s1410, 128, 128, 8
        $region56: #{audio_mlp_forward.1} parent=47 // pred_fallthru
          _
      $region48: #{audio_mlp_forward.1} parent=5 // pred_fallthru
        _
      %p1436 = scmp.le.s32.totalorder 2, %s17
      // Predicated region
      $region57: #{audio_mlp_forward.1} parent=5 // pred_check
        %p1437 = pneg %p1436
      $region58: #{audio_mlp_forward.1} parent=5 // pred_check_branch
        %1439 = sbr.rel (%p1437) target = $region60
      $region59: #{audio_mlp_forward.1} parent=5 // pred_region
        %s1440 = ssub.s32 %s17, 2
        // Predicated region
        $region61: #{audio_mlp_forward.1} parent=59 // pred_check
          %p1441 = pneg %p198
        $region62: #{audio_mlp_forward.1} parent=59 // pred_check_branch
          %1443 = sbr.rel (%p1441) target = $region64
        $region63: #{audio_mlp_forward.1} parent=59 // pred_region
          %s1444 = sand.u32 %s183, 1
          %s1445 = scalar_lea.sflag [#allocation4], %s1444
          %s1446 = sand.u32 %s183, 1
          %s1447 = smul.addr %s1446, 256
          %s1448 = scalar_lea.vmem [#allocation5], %s1447
          %1449 = dma.done %s1445, 4096
        $region64: #{audio_mlp_forward.1} parent=59 // pred_fallthru
          _
      $region60: #{audio_mlp_forward.1} parent=5 // pred_fallthru
        _
    $region6: #{audio_mlp_forward.1} parent=1 // loop_footer
      %s21 = sadd.s32 1, %s17
    $region7: #{audio_mlp_forward.1} parent=1 // loop_footer_branch
      %16 = sbr.rel target = $region3
    $region8: #{audio_mlp_forward.1} parent=1 // loop_exit
      _
    %1450 = vsyncpa [#allocation3], 1
    %s1451 = scalar_lea.sflag [#allocation3], 1
    %1452 = vsyncpa %s1451, 1
    %1453 = vsyncpa [#allocation4], 1
    %s1454 = scalar_lea.sflag [#allocation4], 1
    %1455 = vsyncpa %s1454, 1

</llo_original>
